<compile_context>
chip_gen: v6e
topology: v6e:2x2x1
jax: 0.10.0
libtpu: 0.0.40
codegen_flags: <defaults>
</compile_context>

<pallas_src>
import functools
import math

import jax
import jax.numpy as jnp
from jax.experimental import pallas as pl
from jax.experimental.pallas import tpu as pltpu


def round_up_to_next_multiple_of(x, multiple_of: int) -> int:
    return int((x + multiple_of - 1) // multiple_of * multiple_of)


def _vmem_capacity_bytes() -> int:
    try:
        return int(pltpu.get_tpu_info().vmem_capacity_bytes)
    except Exception:
        return 64 * 1024 * 1024  # conservative (v7x-sized) fallback


def _choose_tile_m(m: int, tm_max: int) -> int:
    """Largest token tile that keeps M-padding waste small (<~12%)."""
    m8 = round_up_to_next_multiple_of(m, 8)
    if m8 <= tm_max:
        return m8  # single tile; at most 7 padded rows
    best = 8
    for t in (1024, 512, 256, 128, 64, 32, 16, 8):
        if t > tm_max:
            continue
        m_pad = round_up_to_next_multiple_of(m, t)
        if (m_pad - m) / m_pad <= 0.125:
            return t
        best = t
    return best


def _choose_tile_u(u_pad: int, e: int, w_itemsize: int, vmem_cap: int) -> int:
    """Keep the full U resident if weights fit comfortably; else tile U."""
    resident_bytes = 3 * e * u_pad * w_itemsize  # (2,E,U) fused + (U,E) down
    if resident_bytes <= vmem_cap // 4:
        return u_pad
    for t in (512, 384, 256, 128):
        if t <= u_pad and u_pad % t == 0:
            return t
    return u_pad


def prepare_ffn_weights(w_gate, w_up, w_down, *, param_dtype=jnp.bfloat16):
    """One-time weight preprocessing -- call at parameter-init time, NOT per
    forward.  Inputs are in PyTorch nn.Linear layout:
      w_gate, w_up: (U, E);  w_down: (E, U).
    Returns:
      wgu:  (2, E, U_pad)  with [0] = gate^T, [1] = up^T
      wd_t: (U_pad, E)     down^T with zero-padded rows.
    Zero padding of U is exact: silu(0) * 0 == 0 and padded w_down rows are 0.
    """
    u, e = w_gate.shape
    u_pad = round_up_to_next_multiple_of(u, 128)
    wg_t = w_gate.T.astype(param_dtype)
    wu_t = w_up.T.astype(param_dtype)
    wd_t = w_down.T.astype(param_dtype)
    if u_pad != u:
        wg_t = jnp.pad(wg_t, ((0, 0), (0, u_pad - u)))
        wu_t = jnp.pad(wu_t, ((0, 0), (0, u_pad - u)))
        wd_t = jnp.pad(wd_t, ((0, u_pad - u), (0, 0)))
    wgu = jnp.stack([wg_t, wu_t], axis=0)  # (2, E, U_pad) -- one DMA stream
    return wgu, wd_t


def _ffn_kernel(x_ref, wgu_ref, wd_ref, o_ref, *scratch, n_u_tiles):
    # x_ref:   (TM, E)      token tile, original dtype (cast here on the VPU)
    # wgu_ref: (2, E, TU)   [gate^T | up^T] slab for this U tile
    # wd_ref:  (TU, E)      down-projection slab for this U tile
    # o_ref:   (TM, E)
    # scratch: (acc_ref,) f32 accumulator, only present when the U axis is tiled
    x = x_ref[...].astype(wgu_ref.dtype)
    g = jnp.dot(x, wgu_ref[0], preferred_element_type=jnp.float32)
    u = jnp.dot(x, wgu_ref[1], preferred_element_type=jnp.float32)
    # SiLU(g) * u in f32 (exp goes to the EUP; f32 is also required on v5e).
    h = (g * jax.nn.sigmoid(g)) * u
    part = jnp.dot(h.astype(wd_ref.dtype), wd_ref[...],
                   preferred_element_type=jnp.float32)

    if n_u_tiles == 1:
        o_ref[...] = part.astype(o_ref.dtype)
        return

    acc_ref = scratch[0]
    k = pl.program_id(1)

    @pl.when(k == 0)
    def _():
        acc_ref[...] = part

    @pl.when(k > 0)
    def _():
        acc_ref[...] += part

    @pl.when(k == n_u_tiles - 1)
    def _():
        o_ref[...] = acc_ref[...].astype(o_ref.dtype)


def feedforward_pallas(x, wgu, wd_t, *, tile_m=None, tile_u=None,
                       out_dtype=None):
    """x: (B, S, E); wgu/wd_t from prepare_ffn_weights (pre-fused/pre-padded)."""
    b, s, e = x.shape
    two, e_w, u_pad = wgu.shape
    assert two == 2 and e_w == e and wd_t.shape == (u_pad, e)
    m = b * s
    out_dtype = x.dtype if out_dtype is None else out_dtype

    w_itemsize = jnp.dtype(wgu.dtype).itemsize
    x_itemsize = jnp.dtype(x.dtype).itemsize
    o_itemsize = jnp.dtype(out_dtype).itemsize

    vmem_cap = _vmem_capacity_bytes()
    tm_max = 512 if vmem_cap >= 96 * 1024 * 1024 else 256  # v5e/v6e vs v7x
    tm = int(tile_m) if tile_m is not None else _choose_tile_m(m, tm_max)
    tm = max(8, round_up_to_next_multiple_of(
        min(tm, round_up_to_next_multiple_of(m, 8)), 8))
    m_pad = round_up_to_next_multiple_of(m, tm)

    tu = int(tile_u) if tile_u is not None else _choose_tile_u(
        u_pad, e, w_itemsize, vmem_cap)
    if u_pad % tu != 0:
        raise ValueError("tile_u must divide the (128-padded) up-projection dim")

    n_m = m_pad // tm
    n_k = u_pad // tu
    weights_resident = (n_k == 1)  # constant index_map -> 1 buffer suffices

    x2d = x.reshape(m, e)
    if m_pad != m:
        x2d = jnp.pad(x2d, ((0, m_pad - m), (0, 0)))

    def build_specs(single_buffer_weights):
        w_kwargs = {}
        if single_buffer_weights:
            w_kwargs = dict(pipeline_mode=pl.Buffered(1))
        in_specs = [
            pl.BlockSpec((tm, e), lambda i, k: (i, 0)),            # x tile
            pl.BlockSpec((2, e, tu), lambda i, k: (0, 0, k), **w_kwargs),
            pl.BlockSpec((tu, e), lambda i, k: (k, 0), **w_kwargs),
        ]
        out_spec = pl.BlockSpec((tm, e), lambda i, k: (i, 0))
        return in_specs, out_spec

    def vmem_limit(single_buffer_weights):
        w_nbuf = 1 if single_buffer_weights else 2
        need = (2 * tm * e * (x_itemsize + o_itemsize)      # x/out dbl-buffered
                + w_nbuf * 3 * e * tu * w_itemsize          # weight slabs
                + tm * e * 4                                 # f32 accumulator
                + 3 * tm * tu * 4)                           # f32 g, u, h
        need = int(1.25 * need) + (1 << 20)
        return int(min(max(need, 32 * 1024 * 1024), int(0.85 * vmem_cap)))

    weight_read_bytes = 3 * e * u_pad * w_itemsize * (n_m if n_k > 1 else 1)
    cost = pl.CostEstimate(
        flops=2 * m_pad * e * (2 * u_pad) + 2 * m_pad * u_pad * e,
        transcendentals=m_pad * u_pad,
        bytes_accessed=m_pad * e * (x_itemsize + o_itemsize) + weight_read_bytes,
    )

    kernel = functools.partial(_ffn_kernel, n_u_tiles=n_k)
    scratch_shapes = [] if n_k == 1 else [pltpu.VMEM((tm, e), jnp.float32)]
    out_shape = jax.ShapeDtypeStruct((m_pad, e), out_dtype)

    def run(single_buffer_weights):
        in_specs, out_spec = build_specs(single_buffer_weights)
        return pl.pallas_call(
            kernel,
            out_shape=out_shape,
            grid_spec=pltpu.PrefetchScalarGridSpec(
                num_scalar_prefetch=0,
                grid=(n_m, n_k),                    # reduction axis (U) last
                in_specs=in_specs,
                out_specs=out_spec,
                scratch_shapes=scratch_shapes,
            ),
            compiler_params=pltpu.CompilerParams(
                dimension_semantics=("parallel", "arbitrary"),
                vmem_limit_bytes=vmem_limit(single_buffer_weights),
            ),
            cost_estimate=cost,
        )(x2d, wgu, wd_t)

    if weights_resident:
        try:
            out = run(single_buffer_weights=True)
        except Exception:
            # Fallback for jax versions without BlockSpec pipeline_mode /
            # Buffered(1) support; same semantics, just double-buffered weights.
            out = run(single_buffer_weights=False)
    else:
        out = run(single_buffer_weights=False)

    if m_pad != m:
        out = out[:m]
    return out.reshape(b, s, e)


def feedforward_ref(x, w_gate, w_up, w_down):
    g = x @ w_gate.T
    u = x @ w_up.T
    return ((g * jax.nn.sigmoid(g)) * u) @ w_down.T


if __name__ == "__main__":
    def make_case(key, embedding_dim, batch, seqlen):
        ffn_proj_factor = 2.6667
        ffn_round_up_to_multiple_of = 64
        up_dim = round_up_to_next_multiple_of(
            embedding_dim * ffn_proj_factor, ffn_round_up_to_multiple_of)
        kx, kg, ku, kd = jax.random.split(key, 4)
        bound_e = 1.0 / math.sqrt(embedding_dim)
        bound_u = 1.0 / math.sqrt(up_dim)
        x = jax.random.normal(kx, (batch, seqlen, embedding_dim), jnp.float32)
        w_gate = jax.random.uniform(kg, (up_dim, embedding_dim), jnp.float32,
                                    -bound_e, bound_e)
        w_up = jax.random.uniform(ku, (up_dim, embedding_dim), jnp.float32,
                                  -bound_e, bound_e)
        w_down = jax.random.uniform(kd, (embedding_dim, up_dim), jnp.float32,
                                    -bound_u, bound_u)
        return x, w_gate, w_up, w_down

    key = jax.random.PRNGKey(0)
    k1, k2 = jax.random.split(key)

    # Case 1: embedding_dim=128 (lane-dense output, full MXU K), U=384.
    x, w_gate, w_up, w_down = make_case(k1, embedding_dim=128, batch=2, seqlen=8)
    y_ref = feedforward_ref(x, w_gate, w_up, w_down)

    # (a) f32 weights, full-U resident (single-buffered weight path).
    wgu_f32, wd_f32 = prepare_ffn_weights(w_gate, w_up, w_down,
                                          param_dtype=jnp.float32)
    y_f32 = jax.block_until_ready(feedforward_pallas(x, wgu_f32, wd_f32))
    assert y_f32.shape == x.shape
    assert jnp.allclose(y_f32, y_ref, atol=1e-4, rtol=1e-4), "f32 mismatch"

    # (b) bf16 weights (production default), U tiled in 128-wide chunks
    #     (exercises the f32 accumulator / k-axis reduction path).
    wgu_bf16, wd_bf16 = prepare_ffn_weights(w_gate, w_up, w_down)
    y_bf16 = jax.block_until_ready(
        feedforward_pallas(x, wgu_bf16, wd_bf16, tile_u=128))
    assert jnp.allclose(y_bf16, y_ref, atol=5e-2, rtol=5e-2), "bf16 mismatch"

    # Case 2: the original small config (embedding_dim=64 -> U=192, padded to
    # 256) with a ragged token count (exercises M- and U-padding correctness).
    x2, wg2, wu2, wd2 = make_case(k2, embedding_dim=64, batch=2, seqlen=10)
    y2_ref = feedforward_ref(x2, wg2, wu2, wd2)
    wgu2, wdt2 = prepare_ffn_weights(wg2, wu2, wd2, param_dtype=jnp.float32)
    y2 = jax.block_until_ready(feedforward_pallas(x2, wgu2, wdt2))
    assert y2.shape == x2.shape
    assert jnp.allclose(y2, y2_ref, atol=1e-4, rtol=1e-4), "padded-config mismatch"

    print("KERNEL_OK")
</pallas_src>

<mosaic_0001>
module attributes {stable_mosaic.version = 11 : i64} {
  func.func @_ffn_kernel(%arg0: i32, %arg1: i32, %arg2: memref<16x128xf32, #tpu.memory_space<vmem>>, %arg3: memref<2x128x384xf32, #tpu.memory_space<vmem>>, %arg4: memref<384x128xf32, #tpu.memory_space<vmem>>, %arg5: memref<16x128xf32, #tpu.memory_space<vmem>>) attributes {dimension_semantics = [#tpu.dimension_semantics<parallel>, #tpu.dimension_semantics<arbitrary>], iteration_bounds = array<i64: 1, 1>, scalar_prefetch = 0 : i64, scratch_operands = 0 : i64, tpu.core_type = #tpu.core_type<tc>, window_params = [{transform_indices = @transform_0, window_bounds = array<i64: 16, 128>}, {pipeline_mode = #tpu.pipeline_mode<synchronous>, transform_indices = @transform_1, window_bounds = array<i64: 2, 128, 384>}, {pipeline_mode = #tpu.pipeline_mode<synchronous>, transform_indices = @transform_2, window_bounds = array<i64: 384, 128>}, {transform_indices = @transform_3, window_bounds = array<i64: 16, 128>}]} {
    %c0 = arith.constant 0 : index
    %c0_0 = arith.constant 0 : index
    %0 = vector.load %arg2[%c0, %c0_0] : memref<16x128xf32, #tpu.memory_space<vmem>>, vector<16x128xf32>
    %c0_1 = arith.constant 0 : index
    %c0_2 = arith.constant 0 : index
    %c0_3 = arith.constant 0 : index
    %1 = vector.load %arg3[%c0_1, %c0_2, %c0_3] : memref<2x128x384xf32, #tpu.memory_space<vmem>>, vector<1x128x384xf32>
    %2 = vector.shape_cast %1 : vector<1x128x384xf32> to vector<128x384xf32>
    %cst = arith.constant dense<0.000000e+00> : vector<16x384xf32>
    %3 = tpu.matmul %0, %2, %cst {dimension_numbers = #tpu.dot_dimension_numbers<[1], [0], [0], [1], [0, 0, 1, 1], [], []>} : vector<16x128xf32>, vector<128x384xf32>, vector<16x384xf32> -> vector<16x384xf32>
    %c1 = arith.constant 1 : index
    %c0_4 = arith.constant 0 : index
    %c0_5 = arith.constant 0 : index
    %4 = vector.load %arg3[%c1, %c0_4, %c0_5] : memref<2x128x384xf32, #tpu.memory_space<vmem>>, vector<1x128x384xf32>
    %5 = vector.shape_cast %4 : vector<1x128x384xf32> to vector<128x384xf32>
    %cst_6 = arith.constant dense<0.000000e+00> : vector<16x384xf32>
    %6 = tpu.matmul %0, %5, %cst_6 {dimension_numbers = #tpu.dot_dimension_numbers<[1], [0], [0], [1], [0, 0, 1, 1], [], []>} : vector<16x128xf32>, vector<128x384xf32>, vector<16x384xf32> -> vector<16x384xf32>
    %7 = arith.negf %3 : vector<16x384xf32>
    %8 = math.exp %7 : vector<16x384xf32>
    %cst_7 = arith.constant 1.000000e+00 : f32
    %9 = vector.broadcast %cst_7 : f32 to vector<16x384xf32>
    %10 = arith.addf %9, %8 : vector<16x384xf32>
    %11 = arith.divf %9, %10 : vector<16x384xf32>
    %12 = arith.mulf %3, %11 : vector<16x384xf32>
    %13 = arith.mulf %12, %6 : vector<16x384xf32>
    %c0_8 = arith.constant 0 : index
    %c0_9 = arith.constant 0 : index
    %14 = vector.load %arg4[%c0_8, %c0_9] : memref<384x128xf32, #tpu.memory_space<vmem>>, vector<384x128xf32>
    %cst_10 = arith.constant dense<0.000000e+00> : vector<16x128xf32>
    %15 = tpu.matmul %13, %14, %cst_10 {dimension_numbers = #tpu.dot_dimension_numbers<[1], [0], [0], [1], [0, 0, 1, 1], [], []>} : vector<16x384xf32>, vector<384x128xf32>, vector<16x128xf32> -> vector<16x128xf32>
    %c0_11 = arith.constant 0 : index
    %c0_12 = arith.constant 0 : index
    %16 = vector.load %arg5[%c0_11, %c0_12] : memref<16x128xf32, #tpu.memory_space<vmem>>, vector<16x128xf32>
    tpu.vector_store %arg5[%c0_11, %c0_12], %15 {strides = array<i32>} : memref<16x128xf32, #tpu.memory_space<vmem>>, vector<16x128xf32>,
    return
  }
  func.func @transform_0(%arg0: i32, %arg1: i32) -> (i32, i32) {
    %c0_i32 = arith.constant 0 : i32
    %c0_i32_0 = arith.constant 0 : i32
    return %arg0, %c0_i32 : i32, i32
  }
  func.func @transform_1(%arg0: i32, %arg1: i32) -> (i32, i32, i32) {
    %c0_i32 = arith.constant 0 : i32
    %c0_i32_0 = arith.constant 0 : i32
    %c0_i32_1 = arith.constant 0 : i32
    return %c0_i32, %c0_i32_0, %arg1 : i32, i32, i32
  }
  func.func @transform_2(%arg0: i32, %arg1: i32) -> (i32, i32) {
    %c0_i32 = arith.constant 0 : i32
    %c0_i32_0 = arith.constant 0 : i32
    return %arg1, %c0_i32 : i32, i32
  }
  func.func @transform_3(%arg0: i32, %arg1: i32) -> (i32, i32) {
    %c0_i32 = arith.constant 0 : i32
    %c0_i32_0 = arith.constant 0 : i32
    return %arg0, %c0_i32 : i32, i32
  }
}

module attributes {stable_mosaic.version = 11 : i64} {
  func.func @_ffn_kernel(%arg0: i32, %arg1: i32, %arg2: memref<16x128xf32, #tpu.memory_space<vmem>>, %arg3: memref<2x128x384xf32, #tpu.memory_space<vmem>>, %arg4: memref<384x128xf32, #tpu.memory_space<vmem>>, %arg5: memref<16x128xf32, #tpu.memory_space<vmem>>) attributes {dimension_semantics = [#tpu.dimension_semantics<parallel>, #tpu.dimension_semantics<arbitrary>], iteration_bounds = array<i64: 1, 1>, scalar_prefetch = 0 : i64, scratch_operands = 0 : i64, tpu.core_type = #tpu.core_type<tc>, window_params = [{transform_indices = @transform_0, window_bounds = array<i64: 16, 128>}, {transform_indices = @transform_1, window_bounds = array<i64: 2, 128, 384>}, {transform_indices = @transform_2, window_bounds = array<i64: 384, 128>}, {transform_indices = @transform_3, window_bounds = array<i64: 16, 128>}]} {
    %c0 = arith.constant 0 : index
    %c0_0 = arith.constant 0 : index
    %0 = vector.load %arg2[%c0, %c0_0] : memref<16x128xf32, #tpu.memory_space<vmem>>, vector<16x128xf32>
    %c0_1 = arith.constant 0 : index
    %c0_2 = arith.constant 0 : index
    %c0_3 = arith.constant 0 : index
    %1 = vector.load %arg3[%c0_1, %c0_2, %c0_3] : memref<2x128x384xf32, #tpu.memory_space<vmem>>, vector<1x128x384xf32>
    %2 = vector.shape_cast %1 : vector<1x128x384xf32> to vector<128x384xf32>
    %cst = arith.constant dense<0.000000e+00> : vector<16x384xf32>
    %3 = tpu.matmul %0, %2, %cst {dimension_numbers = #tpu.dot_dimension_numbers<[1], [0], [0], [1], [0, 0, 1, 1], [], []>} : vector<16x128xf32>, vector<128x384xf32>, vector<16x384xf32> -> vector<16x384xf32>
    %c1 = arith.constant 1 : index
    %c0_4 = arith.constant 0 : index
    %c0_5 = arith.constant 0 : index
    %4 = vector.load %arg3[%c1, %c0_4, %c0_5] : memref<2x128x384xf32, #tpu.memory_space<vmem>>, vector<1x128x384xf32>
    %5 = vector.shape_cast %4 : vector<1x128x384xf32> to vector<128x384xf32>
    %cst_6 = arith.constant dense<0.000000e+00> : vector<16x384xf32>
    %6 = tpu.matmul %0, %5, %cst_6 {dimension_numbers = #tpu.dot_dimension_numbers<[1], [0], [0], [1], [0, 0, 1, 1], [], []>} : vector<16x128xf32>, vector<128x384xf32>, vector<16x384xf32> -> vector<16x384xf32>
    %7 = arith.negf %3 : vector<16x384xf32>
    %8 = math.exp %7 : vector<16x384xf32>
    %cst_7 = arith.constant 1.000000e+00 : f32
    %9 = vector.broadcast %cst_7 : f32 to vector<16x384xf32>
    %10 = arith.addf %9, %8 : vector<16x384xf32>
    %11 = arith.divf %9, %10 : vector<16x384xf32>
    %12 = arith.mulf %3, %11 : vector<16x384xf32>
    %13 = arith.mulf %12, %6 : vector<16x384xf32>
    %c0_8 = arith.constant 0 : index
    %c0_9 = arith.constant 0 : index
    %14 = vector.load %arg4[%c0_8, %c0_9] : memref<384x128xf32, #tpu.memory_space<vmem>>, vector<384x128xf32>
    %cst_10 = arith.constant dense<0.000000e+00> : vector<16x128xf32>
    %15 = tpu.matmul %13, %14, %cst_10 {dimension_numbers = #tpu.dot_dimension_numbers<[1], [0], [0], [1], [0, 0, 1, 1], [], []>} : vector<16x384xf32>, vector<384x128xf32>, vector<16x128xf32> -> vector<16x128xf32>
    %c0_11 = arith.constant 0 : index
    %c0_12 = arith.constant 0 : index
    %16 = vector.load %arg5[%c0_11, %c0_12] : memref<16x128xf32, #tpu.memory_space<vmem>>, vector<16x128xf32>
    tpu.vector_store %arg5[%c0_11, %c0_12], %15 {strides = array<i32>} : memref<16x128xf32, #tpu.memory_space<vmem>>, vector<16x128xf32>,
    return
  }
  func.func @transform_0(%arg0: i32, %arg1: i32) -> (i32, i32) {
    %c0_i32 = arith.constant 0 : i32
    %c0_i32_0 = arith.constant 0 : i32
    return %arg0, %c0_i32 : i32, i32
  }
  func.func @transform_1(%arg0: i32, %arg1: i32) -> (i32, i32, i32) {
    %c0_i32 = arith.constant 0 : i32
    %c0_i32_0 = arith.constant 0 : i32
    %c0_i32_1 = arith.constant 0 : i32
    return %c0_i32, %c0_i32_0, %arg1 : i32, i32, i32
  }
  func.func @transform_2(%arg0: i32, %arg1: i32) -> (i32, i32) {
    %c0_i32 = arith.constant 0 : i32
    %c0_i32_0 = arith.constant 0 : i32
    return %arg1, %c0_i32 : i32, i32
  }
  func.func @transform_3(%arg0: i32, %arg1: i32) -> (i32, i32) {
    %c0_i32 = arith.constant 0 : i32
    %c0_i32_0 = arith.constant 0 : i32
    return %arg0, %c0_i32 : i32, i32
  }
}

</mosaic_0001>

<llo_original>
// kernel: tpu_custom_call.1
$region0: #{tpu_custom_call.1}
  #allocation0 [shape = 'u32[]', space=smem, size = 0x4, offset = 0x4, fixed_abs, tag = 'smem constant byte address 0x4 - core index']
  #allocation1 [shape = 'u32[144,128]{1,0:T(1,128)}', space=vmem, size = 0x12000, scoped, tag = 'internal scratch']
  %s0 = inlined_call_operand.hbm [shape: f32[16,128], index: 0, kind: input, shape index: {}]
  %s1 = inlined_call_operand.hbm [shape: f32[2,128,384], index: 1, kind: input, shape index: {}]
  %s2 = inlined_call_operand.hbm [shape: f32[384,128], index: 2, kind: input, shape index: {}]
  %s3 = inlined_call_operand.hbm [shape: f32[16,128], index: 3, kind: output, shape index: {}]
  %s4 = sld [smem:[#allocation0]]
  $region34: #{tpu_custom_call.1} parent=0
    _
  %s6 = ssub.s32 1, %s4
  %s7 = scalar_select 0, %s6, %s4
  $region1: #{tpu_custom_call.1} parent=0
    #allocation2 [shape = 'u8[8192]{0}', space=vmem, size = 0x2000, scoped, tag = 'input window, operand 0, single buffered']
    #allocation3 [shape = 's32[1]{0}', space=sflag, size = 0x4, scoped, tag = 'scoped memory for tpu_custom_call.1']
    #allocation4 [shape = 's32[1]{0}', space=sflag, size = 0x4, scoped, tag = 'scoped memory for tpu_custom_call.1']
    #allocation5 [shape = 'u8[393216]{0}', space=vmem, size = 0x60000, scoped, tag = 'input window, operand 1, single buffered']
    #allocation6 [shape = 's32[1]{0}', space=sflag, size = 0x4, scoped, tag = 'scoped memory for tpu_custom_call.1']
    #allocation7 [shape = 'u8[196608]{0}', space=vmem, size = 0x30000, scoped, tag = 'input window, operand 2, single buffered']
    #allocation8 [shape = 'u8[8192]{0}', space=vmem, size = 0x2000, scoped, tag = 'output window, operand 0, single buffered']
    %8 = vsyncpa [#allocation3], 0
    %9 = vsyncpa [#allocation6], 0
    %10 = vsyncpa [#allocation4], 0
    // Predicated region
    $region2: #{tpu_custom_call.1} parent=1 // pred_check
      _
    $region3: #{tpu_custom_call.1} parent=1 // pred_check_branch
      %12 = sbr.rel (0) target = $region5
    $region4: #{tpu_custom_call.1} parent=1 // pred_region
      %s14 = ssub.s32 256, 256
      %15 = vsyncadd [#allocation3], %s14
      %s16 = sshll.u32 [#allocation2], 4
      %s17 = int_to_ptr.vmem [resolvable:$true] %s16
      %22 = dma.hbm_to_vmem [thread:$0]  %s0, 256, %s17, [#allocation3], 128, 128, 8
    $region5: #{tpu_custom_call.1} parent=1 // pred_fallthru
      _
    // Predicated region
    $region6: #{tpu_custom_call.1} parent=1 // pred_check
      _
    $region7: #{tpu_custom_call.1} parent=1 // pred_check_branch
      %24 = sbr.rel (0) target = $region9
    $region8: #{tpu_custom_call.1} parent=1 // pred_region
      %s26 = ssub.s32 12288, 12288
      %27 = vsyncadd [#allocation6], %s26
      %s28 = sshll.u32 [#allocation5], 4
      %s29 = int_to_ptr.vmem [resolvable:$true] %s28
      %34 = dma.hbm_to_vmem [thread:$0]  %s1, 12288, %s29, [#allocation6], 384, 384, 24
    $region9: #{tpu_custom_call.1} parent=1 // pred_fallthru
      _
    // Predicated region
    $region10: #{tpu_custom_call.1} parent=1 // pred_check
      _
    $region11: #{tpu_custom_call.1} parent=1 // pred_check_branch
      %36 = sbr.rel (0) target = $region13
    $region12: #{tpu_custom_call.1} parent=1 // pred_region
      %s38 = ssub.s32 6144, 6144
      %39 = vsyncadd [#allocation6], %s38
      %s40 = sshll.u32 [#allocation7], 4
      %s41 = int_to_ptr.vmem [resolvable:$true] %s40
      %46 = dma.hbm_to_vmem [thread:$0]  %s2, 6144, %s41, [#allocation6], 128, 128, 8
    $region13: #{tpu_custom_call.1} parent=1 // pred_fallthru
      _
    // Predicated region
    $region14: #{tpu_custom_call.1} parent=1 // pred_check
      _
    $region15: #{tpu_custom_call.1} parent=1 // pred_check_branch
      %48 = sbr.rel (0) target = $region17
    $region16: #{tpu_custom_call.1} parent=1 // pred_region
      %49 = dma.done [#allocation3], 256
    $region17: #{tpu_custom_call.1} parent=1 // pred_fallthru
      _
    // Predicated region
    $region18: #{tpu_custom_call.1} parent=1 // pred_check
      _
    $region19: #{tpu_custom_call.1} parent=1 // pred_check_branch
      %51 = sbr.rel (0) target = $region21
    $region20: #{tpu_custom_call.1} parent=1 // pred_region
      %52 = dma.done [#allocation6], 12288
    $region21: #{tpu_custom_call.1} parent=1 // pred_fallthru
      _
    // Predicated region
    $region22: #{tpu_custom_call.1} parent=1 // pred_check
      _
    $region23: #{tpu_custom_call.1} parent=1 // pred_check_branch
      %54 = sbr.rel (0) target = $region25
    $region24: #{tpu_custom_call.1} parent=1 // pred_region
      %55 = dma.done [#allocation6], 6144
    $region25: #{tpu_custom_call.1} parent=1 // pred_fallthru
      _
    %v56 = vld [vmem:[#allocation2] sm:$0xff]
    %v57 = vld [vmem:[#allocation2 + $0x8] sm:$0xff]
    %v58 = vld [vmem:[#allocation5] sm:$0xff]
    %v59 = vld [vmem:[#allocation5 + $0x8] sm:$0xff]
    %v60 = vld [vmem:[#allocation5 + $0x10] sm:$0xff]
    %v61 = vld [vmem:[#allocation5 + $0x18] sm:$0xff]
    %v62 = vld [vmem:[#allocation5 + $0x20] sm:$0xff]
    %v63 = vld [vmem:[#allocation5 + $0x28] sm:$0xff]
    %v64 = vld [vmem:[#allocation5 + $0x30] sm:$0xff]
    %v65 = vld [vmem:[#allocation5 + $0x38] sm:$0xff]
    %v66 = vld [vmem:[#allocation5 + $0x40] sm:$0xff]
    %v67 = vld [vmem:[#allocation5 + $0x48] sm:$0xff]
    %v68 = vld [vmem:[#allocation5 + $0x50] sm:$0xff]
    %v69 = vld [vmem:[#allocation5 + $0x58] sm:$0xff]
    %v70 = vld [vmem:[#allocation5 + $0x60] sm:$0xff]
    %v71 = vld [vmem:[#allocation5 + $0x68] sm:$0xff]
    %v72 = vld [vmem:[#allocation5 + $0x70] sm:$0xff]
    %v73 = vld [vmem:[#allocation5 + $0x78] sm:$0xff]
    %v74 = vld [vmem:[#allocation5 + $0x80] sm:$0xff]
    %v75 = vld [vmem:[#allocation5 + $0x88] sm:$0xff]
    %v76 = vld [vmem:[#allocation5 + $0x90] sm:$0xff]
    %v77 = vld [vmem:[#allocation5 + $0x98] sm:$0xff]
    %v78 = vld [vmem:[#allocation5 + $0xa0] sm:$0xff]
    %v79 = vld [vmem:[#allocation5 + $0xa8] sm:$0xff]
    %v80 = vld [vmem:[#allocation5 + $0xb0] sm:$0xff]
    %v81 = vld [vmem:[#allocation5 + $0xb8] sm:$0xff]
    %v82 = vld [vmem:[#allocation5 + $0xc0] sm:$0xff]
    %v83 = vld [vmem:[#allocation5 + $0xc8] sm:$0xff]
    %v84 = vld [vmem:[#allocation5 + $0xd0] sm:$0xff]
    %v85 = vld [vmem:[#allocation5 + $0xd8] sm:$0xff]
    %v86 = vld [vmem:[#allocation5 + $0xe0] sm:$0xff]
    %v87 = vld [vmem:[#allocation5 + $0xe8] sm:$0xff]
    %v88 = vld [vmem:[#allocation5 + $0xf0] sm:$0xff]
    %v89 = vld [vmem:[#allocation5 + $0xf8] sm:$0xff]
    %v90 = vld [vmem:[#allocation5 + $0x100] sm:$0xff]
    %v91 = vld [vmem:[#allocation5 + $0x108] sm:$0xff]
    %v92 = vld [vmem:[#allocation5 + $0x110] sm:$0xff]
    %v93 = vld [vmem:[#allocation5 + $0x118] sm:$0xff]
    %v94 = vld [vmem:[#allocation5 + $0x120] sm:$0xff]
    %v95 = vld [vmem:[#allocation5 + $0x128] sm:$0xff]
    %v96 = vld [vmem:[#allocation5 + $0x130] sm:$0xff]
    %v97 = vld [vmem:[#allocation5 + $0x138] sm:$0xff]
    %v98 = vld [vmem:[#allocation5 + $0x140] sm:$0xff]
    %v99 = vld [vmem:[#allocation5 + $0x148] sm:$0xff]
    %v100 = vld [vmem:[#allocation5 + $0x150] sm:$0xff]
    %v101 = vld [vmem:[#allocation5 + $0x158] sm:$0xff]
    %v102 = vld [vmem:[#allocation5 + $0x160] sm:$0xff]
    %v103 = vld [vmem:[#allocation5 + $0x168] sm:$0xff]
    %v104 = vld [vmem:[#allocation5 + $0x170] sm:$0xff]
    %v105 = vld [vmem:[#allocation5 + $0x178] sm:$0xff]
    %106 = vmatprep.subr.mxu0 %v104
    %107 = vmatpush1.msra.mxu0 %v103
    %108 = vmatprep.subr.mxu0 %v101
    %109 = vmatpush1.msra.mxu0 %v100
    %110 = vmatprep.subr.mxu0 %v98
    %111 = vmatpush1.msra.mxu0 %v97
    %112 = vmatprep.subr.mxu0 %v95
    %113 = vmatpush1.msra.mxu0 %v94
    %114 = vmatprep.subr.mxu0 %v92
    %115 = vmatpush1.msra.mxu0 %v91
    %116 = vmatprep.subr.mxu0 %v89
    %117 = vmatpush1.msra.mxu0 %v88
    %118 = vmatprep.subr.mxu0 %v86
    %119 = vmatpush1.msra.mxu0 %v85
    %120 = vmatprep.subr.mxu0 %v83
    %121 = vmatpush1.msra.mxu0 %v82
    %122 = vmatprep.subr.mxu0 %v80
    %123 = vmatpush1.msra.mxu0 %v79
    %124 = vmatprep.subr.mxu0 %v77
    %125 = vmatpush1.msra.mxu0 %v76
    %126 = vmatprep.subr.mxu0 %v74
    %127 = vmatpush1.msra.mxu0 %v73
    %128 = vmatprep.subr.mxu0 %v71
    %129 = vmatpush1.msra.mxu0 %v70
    %130 = vmatprep.subr.mxu0 %v68
    %131 = vmatpush1.msra.mxu0 %v67
    %132 = vmatprep.subr.mxu0 %v65
    %133 = vmatpush1.msra.mxu0 %v64
    %134 = vmatprep.subr.mxu0 %v62
    %135 = vmatpush1.msra.mxu0 %v61
    %136 = vmatprep.subr.mxu0 %v59
    %137 = vmatpush1.msra.mxu0 %v58
    %138 = vmatprep.subr.mxu0 0.0
    %139 = vmatpush2.msra.mxu0 0.0
    %140 = vmatprep.subr.mxu0 0.0
    %141 = vmatpush2.msra.mxu0 0.0
    %142 = vmatprep.subr.mxu0 0.0
    %143 = vmatpush2.msra.mxu0 0.0
    %144 = vmatprep.subr.mxu0 0.0
    %145 = vmatpush2.msra.mxu0 0.0
    %146 = vmatprep.subr.mxu0 0.0
    %147 = vmatpush2.msra.mxu0 0.0
    %148 = vmatprep.subr.mxu0 0.0
    %149 = vmatpush2.msra.mxu0 0.0
    %150 = vmatprep.subr.mxu0 0.0
    %151 = vmatpush2.msra.mxu0 0.0
    %152 = vmatprep.subr.mxu0 0.0
    %153 = vmatpush2.msra.mxu0 0.0
    %154 = vmatprep.subr.mxu0 0.0
    %155 = vmatpush2.msra.mxu0 0.0
    %156 = vmatprep.subr.mxu0 0.0
    %157 = vmatpush2.msra.mxu0 0.0
    %158 = vmatprep.subr.mxu0 0.0
    %159 = vmatpush2.msra.mxu0 0.0
    %160 = vmatprep.subr.mxu0 0.0
    %161 = vmatpush2.msra.mxu0 0.0
    %162 = vmatprep.subr.mxu0 0.0
    %163 = vmatpush2.msra.mxu0 0.0
    %164 = vmatprep.subr.mxu0 0.0
    %165 = vmatpush2.msra.mxu0 0.0
    %166 = vmatprep.subr.mxu0 0.0
    %167 = vmatpush2.msra.mxu0 0.0
    %168 = vmatprep.subr.mxu0 0.0
    %169 = vmatpush2.msra.mxu0 0.0
    %170 = vmatprep.mubr.f32.mxu0 0.0
    %171 = vmatmul.mubr.f32.gmra.mxu0 %v56
    %v172 = vpop.f32.mrf.mxu0
    %v173 = vadd.f32 0.0, %v172
    %v174 = vpop.f32.mrf.mxu0
    %v175 = vadd.f32 0.0, %v174
    %176 = vmatprep.mubr.f32.mxu0 0.0
    %177 = vmatmul.mubr.f32.gmra.mxu0 %v57
    %v178 = vpop.f32.mrf.mxu0
    %v179 = vadd.f32 0.0, %v178
    %v180 = vpop.f32.mrf.mxu0
    %v181 = vadd.f32 0.0, %v180
    %182 = vdwg.mxu0
    %183 = vmatprep.subr.mxu0 0.0
    %184 = vmatpush1.msra.mxu0 %v105
    %185 = vmatprep.subr.mxu0 0.0
    %186 = vmatpush1.msra.mxu0 %v102
    %187 = vmatprep.subr.mxu0 0.0
    %188 = vmatpush1.msra.mxu0 %v99
    %189 = vmatprep.subr.mxu0 0.0
    %190 = vmatpush1.msra.mxu0 %v96
    %191 = vmatprep.subr.mxu0 0.0
    %192 = vmatpush1.msra.mxu0 %v93
    %193 = vmatprep.subr.mxu0 0.0
    %194 = vmatpush1.msra.mxu0 %v90
    %195 = vmatprep.subr.mxu0 0.0
    %196 = vmatpush1.msra.mxu0 %v87
    %197 = vmatprep.subr.mxu0 0.0
    %198 = vmatpush1.msra.mxu0 %v84
    %199 = vmatprep.subr.mxu0 0.0
    %200 = vmatpush1.msra.mxu0 %v81
    %201 = vmatprep.subr.mxu0 0.0
    %202 = vmatpush1.msra.mxu0 %v78
    %203 = vmatprep.subr.mxu0 0.0
    %204 = vmatpush1.msra.mxu0 %v75
    %205 = vmatprep.subr.mxu0 0.0
    %206 = vmatpush1.msra.mxu0 %v72
    %207 = vmatprep.subr.mxu0 0.0
    %208 = vmatpush1.msra.mxu0 %v69
    %209 = vmatprep.subr.mxu0 0.0
    %210 = vmatpush1.msra.mxu0 %v66
    %211 = vmatprep.subr.mxu0 0.0
    %212 = vmatpush1.msra.mxu0 %v63
    %213 = vmatprep.subr.mxu0 0.0
    %214 = vmatpush1.msra.mxu0 %v60
    %215 = vmatprep.subr.mxu0 0.0
    %216 = vmatpush2.msra.mxu0 0.0
    %217 = vmatprep.subr.mxu0 0.0
    %218 = vmatpush2.msra.mxu0 0.0
    %219 = vmatprep.subr.mxu0 0.0
    %220 = vmatpush2.msra.mxu0 0.0
    %221 = vmatprep.subr.mxu0 0.0
    %222 = vmatpush2.msra.mxu0 0.0
    %223 = vmatprep.subr.mxu0 0.0
    %224 = vmatpush2.msra.mxu0 0.0
    %225 = vmatprep.subr.mxu0 0.0
    %226 = vmatpush2.msra.mxu0 0.0
    %227 = vmatprep.subr.mxu0 0.0
    %228 = vmatpush2.msra.mxu0 0.0
    %229 = vmatprep.subr.mxu0 0.0
    %230 = vmatpush2.msra.mxu0 0.0
    %231 = vmatprep.subr.mxu0 0.0
    %232 = vmatpush2.msra.mxu0 0.0
    %233 = vmatprep.subr.mxu0 0.0
    %234 = vmatpush2.msra.mxu0 0.0
    %235 = vmatprep.subr.mxu0 0.0
    %236 = vmatpush2.msra.mxu0 0.0
    %237 = vmatprep.subr.mxu0 0.0
    %238 = vmatpush2.msra.mxu0 0.0
    %239 = vmatprep.subr.mxu0 0.0
    %240 = vmatpush2.msra.mxu0 0.0
    %241 = vmatprep.subr.mxu0 0.0
    %242 = vmatpush2.msra.mxu0 0.0
    %243 = vmatprep.subr.mxu0 0.0
    %244 = vmatpush2.msra.mxu0 0.0
    %245 = vmatprep.subr.mxu0 0.0
    %246 = vmatpush2.msra.mxu0 0.0
    %247 = vmatprep.mubr.f32.mxu0 0.0
    %248 = vmatmul.mubr.f32.gmra.mxu0 %v56
    %v249 = vpop.f32.mrf.mxu0
    %v250 = vadd.f32 0.0, %v249
    %v251 = vpop.f32.mrf.mxu0
    %252 = vmatprep.mubr.f32.mxu0 0.0
    %253 = vmatmul.mubr.f32.gmra.mxu0 %v57
    %v254 = vpop.f32.mrf.mxu0
    %v255 = vadd.f32 0.0, %v254
    %v256 = vpop.f32.mrf.mxu0
    %257 = vdwg.mxu0
    %s258 = scalar_lea.vmem [#allocation5], 384
    %v259 = vld [vmem:[%s258] sm:$0xff]
    %v260 = vld [vmem:[%s258 + $0x8] sm:$0xff]
    %v261 = vld [vmem:[%s258 + $0x10] sm:$0xff]
    %v262 = vld [vmem:[%s258 + $0x18] sm:$0xff]
    %v263 = vld [vmem:[%s258 + $0x20] sm:$0xff]
    %v264 = vld [vmem:[%s258 + $0x28] sm:$0xff]
    %v265 = vld [vmem:[%s258 + $0x30] sm:$0xff]
    %v266 = vld [vmem:[%s258 + $0x38] sm:$0xff]
    %v267 = vld [vmem:[%s258 + $0x40] sm:$0xff]
    %v268 = vld [vmem:[%s258 + $0x48] sm:$0xff]
    %v269 = vld [vmem:[%s258 + $0x50] sm:$0xff]
    %v270 = vld [vmem:[%s258 + $0x58] sm:$0xff]
    %v271 = vld [vmem:[%s258 + $0x60] sm:$0xff]
    %v272 = vld [vmem:[%s258 + $0x68] sm:$0xff]
    %v273 = vld [vmem:[%s258 + $0x70] sm:$0xff]
    %v274 = vld [vmem:[%s258 + $0x78] sm:$0xff]
    %v275 = vld [vmem:[%s258 + $0x80] sm:$0xff]
    %v276 = vld [vmem:[%s258 + $0x88] sm:$0xff]
    %v277 = vld [vmem:[%s258 + $0x90] sm:$0xff]
    %v278 = vld [vmem:[%s258 + $0x98] sm:$0xff]
    %v279 = vld [vmem:[%s258 + $0xa0] sm:$0xff]
    %v280 = vld [vmem:[%s258 + $0xa8] sm:$0xff]
    %v281 = vld [vmem:[%s258 + $0xb0] sm:$0xff]
    %v282 = vld [vmem:[%s258 + $0xb8] sm:$0xff]
    %v283 = vld [vmem:[%s258 + $0xc0] sm:$0xff]
    %v284 = vld [vmem:[%s258 + $0xc8] sm:$0xff]
    %v285 = vld [vmem:[%s258 + $0xd0] sm:$0xff]
    %v286 = vld [vmem:[%s258 + $0xd8] sm:$0xff]
    %v287 = vld [vmem:[%s258 + $0xe0] sm:$0xff]
    %v288 = vld [vmem:[%s258 + $0xe8] sm:$0xff]
    %v289 = vld [vmem:[%s258 + $0xf0] sm:$0xff]
    %v290 = vld [vmem:[%s258 + $0xf8] sm:$0xff]
    %v291 = vld [vmem:[%s258 + $0x100] sm:$0xff]
    %v292 = vld [vmem:[%s258 + $0x108] sm:$0xff]
    %v293 = vld [vmem:[%s258 + $0x110] sm:$0xff]
    %v294 = vld [vmem:[%s258 + $0x118] sm:$0xff]
    %v295 = vld [vmem:[%s258 + $0x120] sm:$0xff]
    %v296 = vld [vmem:[%s258 + $0x128] sm:$0xff]
    %v297 = vld [vmem:[%s258 + $0x130] sm:$0xff]
    %v298 = vld [vmem:[%s258 + $0x138] sm:$0xff]
    %v299 = vld [vmem:[%s258 + $0x140] sm:$0xff]
    %v300 = vld [vmem:[%s258 + $0x148] sm:$0xff]
    %v301 = vld [vmem:[%s258 + $0x150] sm:$0xff]
    %v302 = vld [vmem:[%s258 + $0x158] sm:$0xff]
    %v303 = vld [vmem:[%s258 + $0x160] sm:$0xff]
    %v304 = vld [vmem:[%s258 + $0x168] sm:$0xff]
    %v305 = vld [vmem:[%s258 + $0x170] sm:$0xff]
    %v306 = vld [vmem:[%s258 + $0x178] sm:$0xff]
    %307 = vmatprep.subr.mxu0 %v305
    %308 = vmatpush1.msra.mxu0 %v304
    %309 = vmatprep.subr.mxu0 %v302
    %310 = vmatpush1.msra.mxu0 %v301
    %311 = vmatprep.subr.mxu0 %v299
    %312 = vmatpush1.msra.mxu0 %v298
    %313 = vmatprep.subr.mxu0 %v296
    %314 = vmatpush1.msra.mxu0 %v295
    %315 = vmatprep.subr.mxu0 %v293
    %316 = vmatpush1.msra.mxu0 %v292
    %317 = vmatprep.subr.mxu0 %v290
    %318 = vmatpush1.msra.mxu0 %v289
    %319 = vmatprep.subr.mxu0 %v287
    %320 = vmatpush1.msra.mxu0 %v286
    %321 = vmatprep.subr.mxu0 %v284
    %322 = vmatpush1.msra.mxu0 %v283
    %323 = vmatprep.subr.mxu0 %v281
    %324 = vmatpush1.msra.mxu0 %v280
    %325 = vmatprep.subr.mxu0 %v278
    %326 = vmatpush1.msra.mxu0 %v277
    %327 = vmatprep.subr.mxu0 %v275
    %328 = vmatpush1.msra.mxu0 %v274
    %329 = vmatprep.subr.mxu0 %v272
    %330 = vmatpush1.msra.mxu0 %v271
    %331 = vmatprep.subr.mxu0 %v269
    %332 = vmatpush1.msra.mxu0 %v268
    %333 = vmatprep.subr.mxu0 %v266
    %334 = vmatpush1.msra.mxu0 %v265
    %335 = vmatprep.subr.mxu0 %v263
    %336 = vmatpush1.msra.mxu0 %v262
    %337 = vmatprep.subr.mxu0 %v260
    %338 = vmatpush1.msra.mxu0 %v259
    %339 = vmatprep.subr.mxu0 0.0
    %340 = vmatpush2.msra.mxu0 0.0
    %341 = vmatprep.subr.mxu0 0.0
    %342 = vmatpush2.msra.mxu0 0.0
    %343 = vmatprep.subr.mxu0 0.0
    %344 = vmatpush2.msra.mxu0 0.0
    %345 = vmatprep.subr.mxu0 0.0
    %346 = vmatpush2.msra.mxu0 0.0
    %347 = vmatprep.subr.mxu0 0.0
    %348 = vmatpush2.msra.mxu0 0.0
    %349 = vmatprep.subr.mxu0 0.0
    %350 = vmatpush2.msra.mxu0 0.0
    %351 = vmatprep.subr.mxu0 0.0
    %352 = vmatpush2.msra.mxu0 0.0
    %353 = vmatprep.subr.mxu0 0.0
    %354 = vmatpush2.msra.mxu0 0.0
    %355 = vmatprep.subr.mxu0 0.0
    %356 = vmatpush2.msra.mxu0 0.0
    %357 = vmatprep.subr.mxu0 0.0
    %358 = vmatpush2.msra.mxu0 0.0
    %359 = vmatprep.subr.mxu0 0.0
    %360 = vmatpush2.msra.mxu0 0.0
    %361 = vmatprep.subr.mxu0 0.0
    %362 = vmatpush2.msra.mxu0 0.0
    %363 = vmatprep.subr.mxu0 0.0
    %364 = vmatpush2.msra.mxu0 0.0
    %365 = vmatprep.subr.mxu0 0.0
    %366 = vmatpush2.msra.mxu0 0.0
    %367 = vmatprep.subr.mxu0 0.0
    %368 = vmatpush2.msra.mxu0 0.0
    %369 = vmatprep.subr.mxu0 0.0
    %370 = vmatpush2.msra.mxu0 0.0
    %371 = vmatprep.mubr.f32.mxu0 0.0
    %372 = vmatmul.mubr.f32.gmra.mxu0 %v56
    %v373 = vpop.f32.mrf.mxu0
    %v374 = vadd.f32 0.0, %v373
    %v375 = vpop.f32.mrf.mxu0
    %v376 = vadd.f32 0.0, %v375
    %377 = vmatprep.mubr.f32.mxu0 0.0
    %378 = vmatmul.mubr.f32.gmra.mxu0 %v57
    %v379 = vpop.f32.mrf.mxu0
    %v380 = vadd.f32 0.0, %v379
    %v381 = vpop.f32.mrf.mxu0
    %v382 = vadd.f32 0.0, %v381
    %383 = vdwg.mxu0
    %384 = vmatprep.subr.mxu0 0.0
    %385 = vmatpush1.msra.mxu0 %v306
    %386 = vmatprep.subr.mxu0 0.0
    %387 = vmatpush1.msra.mxu0 %v303
    %388 = vmatprep.subr.mxu0 0.0
    %389 = vmatpush1.msra.mxu0 %v300
    %390 = vmatprep.subr.mxu0 0.0
    %391 = vmatpush1.msra.mxu0 %v297
    %392 = vmatprep.subr.mxu0 0.0
    %393 = vmatpush1.msra.mxu0 %v294
    %394 = vmatprep.subr.mxu0 0.0
    %395 = vmatpush1.msra.mxu0 %v291
    %396 = vmatprep.subr.mxu0 0.0
    %397 = vmatpush1.msra.mxu0 %v288
    %398 = vmatprep.subr.mxu0 0.0
    %399 = vmatpush1.msra.mxu0 %v285
    %400 = vmatprep.subr.mxu0 0.0
    %401 = vmatpush1.msra.mxu0 %v282
    %402 = vmatprep.subr.mxu0 0.0
    %403 = vmatpush1.msra.mxu0 %v279
    %404 = vmatprep.subr.mxu0 0.0
    %405 = vmatpush1.msra.mxu0 %v276
    %406 = vmatprep.subr.mxu0 0.0
    %407 = vmatpush1.msra.mxu0 %v273
    %408 = vmatprep.subr.mxu0 0.0
    %409 = vmatpush1.msra.mxu0 %v270
    %410 = vmatprep.subr.mxu0 0.0
    %411 = vmatpush1.msra.mxu0 %v267
    %412 = vmatprep.subr.mxu0 0.0
    %413 = vmatpush1.msra.mxu0 %v264
    %414 = vmatprep.subr.mxu0 0.0
    %415 = vmatpush1.msra.mxu0 %v261
    %416 = vmatprep.subr.mxu0 0.0
    %417 = vmatpush2.msra.mxu0 0.0
    %418 = vmatprep.subr.mxu0 0.0
    %419 = vmatpush2.msra.mxu0 0.0
    %420 = vmatprep.subr.mxu0 0.0
    %421 = vmatpush2.msra.mxu0 0.0
    %422 = vmatprep.subr.mxu0 0.0
    %423 = vmatpush2.msra.mxu0 0.0
    %424 = vmatprep.subr.mxu0 0.0
    %425 = vmatpush2.msra.mxu0 0.0
    %426 = vmatprep.subr.mxu0 0.0
    %427 = vmatpush2.msra.mxu0 0.0
    %428 = vmatprep.subr.mxu0 0.0
    %429 = vmatpush2.msra.mxu0 0.0
    %430 = vmatprep.subr.mxu0 0.0
    %431 = vmatpush2.msra.mxu0 0.0
    %432 = vmatprep.subr.mxu0 0.0
    %433 = vmatpush2.msra.mxu0 0.0
    %434 = vmatprep.subr.mxu0 0.0
    %435 = vmatpush2.msra.mxu0 0.0
    %436 = vmatprep.subr.mxu0 0.0
    %437 = vmatpush2.msra.mxu0 0.0
    %438 = vmatprep.subr.mxu0 0.0
    %439 = vmatpush2.msra.mxu0 0.0
    %440 = vmatprep.subr.mxu0 0.0
    %441 = vmatpush2.msra.mxu0 0.0
    %442 = vmatprep.subr.mxu0 0.0
    %443 = vmatpush2.msra.mxu0 0.0
    %444 = vmatprep.subr.mxu0 0.0
    %445 = vmatpush2.msra.mxu0 0.0
    %446 = vmatprep.subr.mxu0 0.0
    %447 = vmatpush2.msra.mxu0 0.0
    %448 = vmatprep.mubr.f32.mxu0 0.0
    %449 = vmatmul.mubr.f32.gmra.mxu0 %v56
    %v450 = vpop.f32.mrf.mxu0
    %v451 = vadd.f32 0.0, %v450
    %v452 = vpop.f32.mrf.mxu0
    %453 = vmatprep.mubr.f32.mxu0 0.0
    %454 = vmatmul.mubr.f32.gmra.mxu0 %v57
    %v455 = vpop.f32.mrf.mxu0
    %v456 = vadd.f32 0.0, %v455
    %v457 = vpop.f32.mrf.mxu0
    %458 = vdwg.mxu0
    %v459 = vxor.u32 %v173, 2147483648
    %v460 = vxor.u32 %v175, 2147483648
    %v461 = vxor.u32 %v250, 2147483648
    %v462 = vxor.u32 %v179, 2147483648
    %v463 = vxor.u32 %v181, 2147483648
    %v464 = vxor.u32 %v255, 2147483648
    %v465 = vmul.f32 %v459, 1.442695
    %v466 = vpow.pop %v465
    %v467 = vmul.f32 %v460, 1.442695
    %v468 = vpow.pop %v467
    %v469 = vmul.f32 %v461, 1.442695
    %v470 = vpow.pop %v469
    %v471 = vmul.f32 %v462, 1.442695
    %v472 = vpow.pop %v471
    %v473 = vmul.f32 %v463, 1.442695
    %v474 = vpow.pop %v473
    %v475 = vmul.f32 %v464, 1.442695
    %v476 = vpow.pop %v475
    %v477 = vadd.f32 %v466, 1.0
    %v478 = vadd.f32 %v468, 1.0
    %v479 = vadd.f32 %v470, 1.0
    %v480 = vadd.f32 %v472, 1.0
    %v481 = vadd.f32 %v474, 1.0
    %v482 = vadd.f32 %v476, 1.0
    %v483 = vrcp.pop %v477
    %v484 = vmul.f32 1.0, %v483
    %v485 = vrcp.pop %v478
    %v486 = vmul.f32 1.0, %v485
    %v487 = vrcp.pop %v479
    %v488 = vmul.f32 1.0, %v487
    %v489 = vrcp.pop %v480
    %v490 = vmul.f32 1.0, %v489
    %v491 = vrcp.pop %v481
    %v492 = vmul.f32 1.0, %v491
    %v493 = vrcp.pop %v482
    %v494 = vmul.f32 1.0, %v493
    %v495 = vmul.f32 %v173, %v484
    %v496 = vmul.f32 %v175, %v486
    %v497 = vmul.f32 %v250, %v488
    %v498 = vmul.f32 %v179, %v490
    %v499 = vmul.f32 %v181, %v492
    %v500 = vmul.f32 %v255, %v494
    %v501 = vmul.f32 %v495, %v374
    %v502 = vmul.f32 %v496, %v376
    %v503 = vmul.f32 %v497, %v451
    %v504 = vmul.f32 %v498, %v380
    %v505 = vmul.f32 %v499, %v382
    %v506 = vmul.f32 %v500, %v456
    %v507 = vld [vmem:[#allocation7] sm:$0xff]
    %v508 = vld [vmem:[#allocation7 + $0x8] sm:$0xff]
    %v509 = vld [vmem:[#allocation7 + $0x10] sm:$0xff]
    %v510 = vld [vmem:[#allocation7 + $0x18] sm:$0xff]
    %v511 = vld [vmem:[#allocation7 + $0x20] sm:$0xff]
    %v512 = vld [vmem:[#allocation7 + $0x28] sm:$0xff]
    %v513 = vld [vmem:[#allocation7 + $0x30] sm:$0xff]
    %v514 = vld [vmem:[#allocation7 + $0x38] sm:$0xff]
    %v515 = vld [vmem:[#allocation7 + $0x40] sm:$0xff]
    %v516 = vld [vmem:[#allocation7 + $0x48] sm:$0xff]
    %v517 = vld [vmem:[#allocation7 + $0x50] sm:$0xff]
    %v518 = vld [vmem:[#allocation7 + $0x58] sm:$0xff]
    %v519 = vld [vmem:[#allocation7 + $0x60] sm:$0xff]
    %v520 = vld [vmem:[#allocation7 + $0x68] sm:$0xff]
    %v521 = vld [vmem:[#allocation7 + $0x70] sm:$0xff]
    %v522 = vld [vmem:[#allocation7 + $0x78] sm:$0xff]
    %v523 = vld [vmem:[#allocation7 + $0x80] sm:$0xff]
    %v524 = vld [vmem:[#allocation7 + $0x88] sm:$0xff]
    %v525 = vld [vmem:[#allocation7 + $0x90] sm:$0xff]
    %v526 = vld [vmem:[#allocation7 + $0x98] sm:$0xff]
    %v527 = vld [vmem:[#allocation7 + $0xa0] sm:$0xff]
    %v528 = vld [vmem:[#allocation7 + $0xa8] sm:$0xff]
    %v529 = vld [vmem:[#allocation7 + $0xb0] sm:$0xff]
    %v530 = vld [vmem:[#allocation7 + $0xb8] sm:$0xff]
    %v531 = vld [vmem:[#allocation7 + $0xc0] sm:$0xff]
    %v532 = vld [vmem:[#allocation7 + $0xc8] sm:$0xff]
    %v533 = vld [vmem:[#allocation7 + $0xd0] sm:$0xff]
    %v534 = vld [vmem:[#allocation7 + $0xd8] sm:$0xff]
    %v535 = vld [vmem:[#allocation7 + $0xe0] sm:$0xff]
    %v536 = vld [vmem:[#allocation7 + $0xe8] sm:$0xff]
    %v537 = vld [vmem:[#allocation7 + $0xf0] sm:$0xff]
    %v538 = vld [vmem:[#allocation7 + $0xf8] sm:$0xff]
    %v539 = vld [vmem:[#allocation7 + $0x100] sm:$0xff]
    %v540 = vld [vmem:[#allocation7 + $0x108] sm:$0xff]
    %v541 = vld [vmem:[#allocation7 + $0x110] sm:$0xff]
    %v542 = vld [vmem:[#allocation7 + $0x118] sm:$0xff]
    %v543 = vld [vmem:[#allocation7 + $0x120] sm:$0xff]
    %v544 = vld [vmem:[#allocation7 + $0x128] sm:$0xff]
    %v545 = vld [vmem:[#allocation7 + $0x130] sm:$0xff]
    %v546 = vld [vmem:[#allocation7 + $0x138] sm:$0xff]
    %v547 = vld [vmem:[#allocation7 + $0x140] sm:$0xff]
    %v548 = vld [vmem:[#allocation7 + $0x148] sm:$0xff]
    %v549 = vld [vmem:[#allocation7 + $0x150] sm:$0xff]
    %v550 = vld [vmem:[#allocation7 + $0x158] sm:$0xff]
    %v551 = vld [vmem:[#allocation7 + $0x160] sm:$0xff]
    %v552 = vld [vmem:[#allocation7 + $0x168] sm:$0xff]
    %v553 = vld [vmem:[#allocation7 + $0x170] sm:$0xff]
    %v554 = vld [vmem:[#allocation7 + $0x178] sm:$0xff]
    %555 = vmatprep.subr.mxu0 0.0
    %556 = vmatpush1.msra.mxu0 %v522
    %557 = vmatprep.subr.mxu0 0.0
    %558 = vmatpush1.msra.mxu0 %v521
    %559 = vmatprep.subr.mxu0 0.0
    %560 = vmatpush1.msra.mxu0 %v520
    %561 = vmatprep.subr.mxu0 0.0
    %562 = vmatpush1.msra.mxu0 %v519
    %563 = vmatprep.subr.mxu0 0.0
    %564 = vmatpush1.msra.mxu0 %v518
    %565 = vmatprep.subr.mxu0 0.0
    %566 = vmatpush1.msra.mxu0 %v517
    %567 = vmatprep.subr.mxu0 0.0
    %568 = vmatpush1.msra.mxu0 %v516
    %569 = vmatprep.subr.mxu0 0.0
    %570 = vmatpush1.msra.mxu0 %v515
    %571 = vmatprep.subr.mxu0 0.0
    %572 = vmatpush1.msra.mxu0 %v514
    %573 = vmatprep.subr.mxu0 0.0
    %574 = vmatpush1.msra.mxu0 %v513
    %575 = vmatprep.subr.mxu0 0.0
    %576 = vmatpush1.msra.mxu0 %v512
    %577 = vmatprep.subr.mxu0 0.0
    %578 = vmatpush1.msra.mxu0 %v511
    %579 = vmatprep.subr.mxu0 0.0
    %580 = vmatpush1.msra.mxu0 %v510
    %581 = vmatprep.subr.mxu0 0.0
    %582 = vmatpush1.msra.mxu0 %v509
    %583 = vmatprep.subr.mxu0 0.0
    %584 = vmatpush1.msra.mxu0 %v508
    %585 = vmatprep.subr.mxu0 0.0
    %586 = vmatpush1.msra.mxu0 %v507
    %587 = vmatprep.subr.mxu0 0.0
    %588 = vmatpush2.msra.mxu0 %v538
    %589 = vmatprep.subr.mxu0 0.0
    %590 = vmatpush2.msra.mxu0 %v537
    %591 = vmatprep.subr.mxu0 0.0
    %592 = vmatpush2.msra.mxu0 %v536
    %593 = vmatprep.subr.mxu0 0.0
    %594 = vmatpush2.msra.mxu0 %v535
    %595 = vmatprep.subr.mxu0 0.0
    %596 = vmatpush2.msra.mxu0 %v534
    %597 = vmatprep.subr.mxu0 0.0
    %598 = vmatpush2.msra.mxu0 %v533
    %599 = vmatprep.subr.mxu0 0.0
    %600 = vmatpush2.msra.mxu0 %v532
    %601 = vmatprep.subr.mxu0 0.0
    %602 = vmatpush2.msra.mxu0 %v531
    %603 = vmatprep.subr.mxu0 0.0
    %604 = vmatpush2.msra.mxu0 %v530
    %605 = vmatprep.subr.mxu0 0.0
    %606 = vmatpush2.msra.mxu0 %v529
    %607 = vmatprep.subr.mxu0 0.0
    %608 = vmatpush2.msra.mxu0 %v528
    %609 = vmatprep.subr.mxu0 0.0
    %610 = vmatpush2.msra.mxu0 %v527
    %611 = vmatprep.subr.mxu0 0.0
    %612 = vmatpush2.msra.mxu0 %v526
    %613 = vmatprep.subr.mxu0 0.0
    %614 = vmatpush2.msra.mxu0 %v525
    %615 = vmatprep.subr.mxu0 0.0
    %616 = vmatpush2.msra.mxu0 %v524
    %617 = vmatprep.subr.mxu0 0.0
    %618 = vmatpush2.msra.mxu0 %v523
    %619 = vmatprep.mubr.f32.mxu0 %v502
    %620 = vmatmul.mubr.f32.gmra.mxu0 %v501
    %v621 = vpop.f32.mrf.mxu0
    %v622 = vadd.f32 0.0, %v621
    %v623 = vpop.f32.mrf.mxu0
    %624 = vmatprep.mubr.f32.mxu0 %v505
    %625 = vmatmul.mubr.f32.gmra.mxu0 %v504
    %v626 = vpop.f32.mrf.mxu0
    %v627 = vadd.f32 0.0, %v626
    %v628 = vpop.f32.mrf.mxu0
    %629 = vdwg.mxu0
    %630 = vmatprep.subr.mxu0 0.0
    %631 = vmatpush1.msra.mxu0 %v554
    %632 = vmatprep.subr.mxu0 0.0
    %633 = vmatpush1.msra.mxu0 %v553
    %634 = vmatprep.subr.mxu0 0.0
    %635 = vmatpush1.msra.mxu0 %v552
    %636 = vmatprep.subr.mxu0 0.0
    %637 = vmatpush1.msra.mxu0 %v551
    %638 = vmatprep.subr.mxu0 0.0
    %639 = vmatpush1.msra.mxu0 %v550
    %640 = vmatprep.subr.mxu0 0.0
    %641 = vmatpush1.msra.mxu0 %v549
    %642 = vmatprep.subr.mxu0 0.0
    %643 = vmatpush1.msra.mxu0 %v548
    %644 = vmatprep.subr.mxu0 0.0
    %645 = vmatpush1.msra.mxu0 %v547
    %646 = vmatprep.subr.mxu0 0.0
    %647 = vmatpush1.msra.mxu0 %v546
    %648 = vmatprep.subr.mxu0 0.0
    %649 = vmatpush1.msra.mxu0 %v545
    %650 = vmatprep.subr.mxu0 0.0
    %651 = vmatpush1.msra.mxu0 %v544
    %652 = vmatprep.subr.mxu0 0.0
    %653 = vmatpush1.msra.mxu0 %v543
    %654 = vmatprep.subr.mxu0 0.0
    %655 = vmatpush1.msra.mxu0 %v542
    %656 = vmatprep.subr.mxu0 0.0
    %657 = vmatpush1.msra.mxu0 %v541
    %658 = vmatprep.subr.mxu0 0.0
    %659 = vmatpush1.msra.mxu0 %v540
    %660 = vmatprep.subr.mxu0 0.0
    %661 = vmatpush1.msra.mxu0 %v539
    %662 = vmatprep.subr.mxu0 0.0
    %663 = vmatpush2.msra.mxu0 0.0
    %664 = vmatprep.subr.mxu0 0.0
    %665 = vmatpush2.msra.mxu0 0.0
    %666 = vmatprep.subr.mxu0 0.0
    %667 = vmatpush2.msra.mxu0 0.0
    %668 = vmatprep.subr.mxu0 0.0
    %669 = vmatpush2.msra.mxu0 0.0
    %670 = vmatprep.subr.mxu0 0.0
    %671 = vmatpush2.msra.mxu0 0.0
    %672 = vmatprep.subr.mxu0 0.0
    %673 = vmatpush2.msra.mxu0 0.0
    %674 = vmatprep.subr.mxu0 0.0
    %675 = vmatpush2.msra.mxu0 0.0
    %676 = vmatprep.subr.mxu0 0.0
    %677 = vmatpush2.msra.mxu0 0.0
    %678 = vmatprep.subr.mxu0 0.0
    %679 = vmatpush2.msra.mxu0 0.0
    %680 = vmatprep.subr.mxu0 0.0
    %681 = vmatpush2.msra.mxu0 0.0
    %682 = vmatprep.subr.mxu0 0.0
    %683 = vmatpush2.msra.mxu0 0.0
    %684 = vmatprep.subr.mxu0 0.0
    %685 = vmatpush2.msra.mxu0 0.0
    %686 = vmatprep.subr.mxu0 0.0
    %687 = vmatpush2.msra.mxu0 0.0
    %688 = vmatprep.subr.mxu0 0.0
    %689 = vmatpush2.msra.mxu0 0.0
    %690 = vmatprep.subr.mxu0 0.0
    %691 = vmatpush2.msra.mxu0 0.0
    %692 = vmatprep.subr.mxu0 0.0
    %693 = vmatpush2.msra.mxu0 0.0
    %694 = vmatprep.mubr.f32.mxu0 0.0
    %695 = vmatmul.mubr.f32.gmra.mxu0 %v503
    %v696 = vpop.f32.mrf.mxu0
    %v697 = vadd.f32 %v622, %v696
    %v698 = vpop.f32.mrf.mxu0
    %699 = vmatprep.mubr.f32.mxu0 0.0
    %700 = vmatmul.mubr.f32.gmra.mxu0 %v506
    %v701 = vpop.f32.mrf.mxu0
    %v702 = vadd.f32 %v627, %v701
    %v703 = vpop.f32.mrf.mxu0
    %704 = vdwg.mxu0
    %705 = vst [vmem:[#allocation8] sm:$0xff] %v697
    %706 = vst [vmem:[#allocation8 + $0x8] sm:$0xff] %v702
    // Predicated region
    $region26: #{tpu_custom_call.1} parent=1 // pred_check
      _
    $region27: #{tpu_custom_call.1} parent=1 // pred_check_branch
      %708 = sbr.rel (0) target = $region29
    $region28: #{tpu_custom_call.1} parent=1 // pred_region
      %s710 = ssub.s32 256, 256
      %711 = vsyncadd [#allocation4], %s710
      %s712 = sshll.u32 [#allocation8], 4
      %s713 = int_to_ptr.vmem [resolvable:$true] %s712
      %718 = dma.vmem_to_hbm [thread:$0]  %s713, 256, %s3, [#allocation4], 128, 128, 8
    $region29: #{tpu_custom_call.1} parent=1 // pred_fallthru
      _
    // Predicated region
    $region30: #{tpu_custom_call.1} parent=1 // pred_check
      _
    $region31: #{tpu_custom_call.1} parent=1 // pred_check_branch
      %720 = sbr.rel (0) target = $region33
    $region32: #{tpu_custom_call.1} parent=1 // pred_region
      %721 = dma.done [#allocation4], 256
    $region33: #{tpu_custom_call.1} parent=1 // pred_fallthru
      _
    %722 = vsyncpa [#allocation3], 1
    %723 = vsyncpa [#allocation6], 1
    %724 = vsyncpa [#allocation4], 1

// kernel: tpu_custom_call.1
$region0: #{tpu_custom_call.1}
  #allocation0 [shape = 'u32[]', space=smem, size = 0x4, offset = 0x4, fixed_abs, tag = 'smem constant byte address 0x4 - core index']
  #allocation1 [shape = 'u32[144,128]{1,0:T(1,128)}', space=vmem, size = 0x12000, scoped, tag = 'internal scratch']
  %s0 = inlined_call_operand.hbm [shape: f32[16,128], index: 0, kind: input, shape index: {}]
  %s1 = inlined_call_operand.hbm [shape: f32[2,128,384], index: 1, kind: input, shape index: {}]
  %s2 = inlined_call_operand.hbm [shape: f32[384,128], index: 2, kind: input, shape index: {}]
  %s3 = inlined_call_operand.hbm [shape: f32[16,128], index: 3, kind: output, shape index: {}]
  %s4 = sld [smem:[#allocation0]]
  $region34: #{tpu_custom_call.1} parent=0
    _
  %s6 = ssub.s32 1, %s4
  %s7 = scalar_select 0, %s6, %s4
  $region1: #{tpu_custom_call.1} parent=0
    #allocation2 [shape = 'u8[8192]{0}', space=vmem, size = 0x2000, scoped, tag = 'input window, operand 0, single buffered']
    #allocation3 [shape = 's32[1]{0}', space=sflag, size = 0x4, scoped, tag = 'scoped memory for tpu_custom_call.1']
    #allocation4 [shape = 's32[1]{0}', space=sflag, size = 0x4, scoped, tag = 'scoped memory for tpu_custom_call.1']
    #allocation5 [shape = 'u8[393216]{0}', space=vmem, size = 0x60000, scoped, tag = 'input window, operand 1, single buffered']
    #allocation6 [shape = 's32[1]{0}', space=sflag, size = 0x4, scoped, tag = 'scoped memory for tpu_custom_call.1']
    #allocation7 [shape = 'u8[196608]{0}', space=vmem, size = 0x30000, scoped, tag = 'input window, operand 2, single buffered']
    #allocation8 [shape = 'u8[8192]{0}', space=vmem, size = 0x2000, scoped, tag = 'output window, operand 0, single buffered']
    %8 = vsyncpa [#allocation3], 0
    %9 = vsyncpa [#allocation6], 0
    %10 = vsyncpa [#allocation4], 0
    // Predicated region
    $region2: #{tpu_custom_call.1} parent=1 // pred_check
      _
    $region3: #{tpu_custom_call.1} parent=1 // pred_check_branch
      %12 = sbr.rel (0) target = $region5
    $region4: #{tpu_custom_call.1} parent=1 // pred_region
      %s14 = ssub.s32 256, 256
      %15 = vsyncadd [#allocation3], %s14
      %s16 = sshll.u32 [#allocation2], 4
      %s17 = int_to_ptr.vmem [resolvable:$true] %s16
      %22 = dma.hbm_to_vmem [thread:$0]  %s0, 256, %s17, [#allocation3], 128, 128, 8
    $region5: #{tpu_custom_call.1} parent=1 // pred_fallthru
      _
    // Predicated region
    $region6: #{tpu_custom_call.1} parent=1 // pred_check
      _
    $region7: #{tpu_custom_call.1} parent=1 // pred_check_branch
      %24 = sbr.rel (0) target = $region9
    $region8: #{tpu_custom_call.1} parent=1 // pred_region
      %s26 = ssub.s32 12288, 12288
      %27 = vsyncadd [#allocation6], %s26
      %s28 = sshll.u32 [#allocation5], 4
      %s29 = int_to_ptr.vmem [resolvable:$true] %s28
      %34 = dma.hbm_to_vmem [thread:$0]  %s1, 12288, %s29, [#allocation6], 384, 384, 24
    $region9: #{tpu_custom_call.1} parent=1 // pred_fallthru
      _
    // Predicated region
    $region10: #{tpu_custom_call.1} parent=1 // pred_check
      _
    $region11: #{tpu_custom_call.1} parent=1 // pred_check_branch
      %36 = sbr.rel (0) target = $region13
    $region12: #{tpu_custom_call.1} parent=1 // pred_region
      %s38 = ssub.s32 6144, 6144
      %39 = vsyncadd [#allocation6], %s38
      %s40 = sshll.u32 [#allocation7], 4
      %s41 = int_to_ptr.vmem [resolvable:$true] %s40
      %46 = dma.hbm_to_vmem [thread:$0]  %s2, 6144, %s41, [#allocation6], 128, 128, 8
    $region13: #{tpu_custom_call.1} parent=1 // pred_fallthru
      _
    // Predicated region
    $region14: #{tpu_custom_call.1} parent=1 // pred_check
      _
    $region15: #{tpu_custom_call.1} parent=1 // pred_check_branch
      %48 = sbr.rel (0) target = $region17
    $region16: #{tpu_custom_call.1} parent=1 // pred_region
      %49 = dma.done [#allocation3], 256
    $region17: #{tpu_custom_call.1} parent=1 // pred_fallthru
      _
    // Predicated region
    $region18: #{tpu_custom_call.1} parent=1 // pred_check
      _
    $region19: #{tpu_custom_call.1} parent=1 // pred_check_branch
      %51 = sbr.rel (0) target = $region21
    $region20: #{tpu_custom_call.1} parent=1 // pred_region
      %52 = dma.done [#allocation6], 12288
    $region21: #{tpu_custom_call.1} parent=1 // pred_fallthru
      _
    // Predicated region
    $region22: #{tpu_custom_call.1} parent=1 // pred_check
      _
    $region23: #{tpu_custom_call.1} parent=1 // pred_check_branch
      %54 = sbr.rel (0) target = $region25
    $region24: #{tpu_custom_call.1} parent=1 // pred_region
      %55 = dma.done [#allocation6], 6144
    $region25: #{tpu_custom_call.1} parent=1 // pred_fallthru
      _
    %v56 = vld [vmem:[#allocation2] sm:$0xff]
    %v57 = vld [vmem:[#allocation2 + $0x8] sm:$0xff]
    %v58 = vld [vmem:[#allocation5] sm:$0xff]
    %v59 = vld [vmem:[#allocation5 + $0x8] sm:$0xff]
    %v60 = vld [vmem:[#allocation5 + $0x10] sm:$0xff]
    %v61 = vld [vmem:[#allocation5 + $0x18] sm:$0xff]
    %v62 = vld [vmem:[#allocation5 + $0x20] sm:$0xff]
    %v63 = vld [vmem:[#allocation5 + $0x28] sm:$0xff]
    %v64 = vld [vmem:[#allocation5 + $0x30] sm:$0xff]
    %v65 = vld [vmem:[#allocation5 + $0x38] sm:$0xff]
    %v66 = vld [vmem:[#allocation5 + $0x40] sm:$0xff]
    %v67 = vld [vmem:[#allocation5 + $0x48] sm:$0xff]
    %v68 = vld [vmem:[#allocation5 + $0x50] sm:$0xff]
    %v69 = vld [vmem:[#allocation5 + $0x58] sm:$0xff]
    %v70 = vld [vmem:[#allocation5 + $0x60] sm:$0xff]
    %v71 = vld [vmem:[#allocation5 + $0x68] sm:$0xff]
    %v72 = vld [vmem:[#allocation5 + $0x70] sm:$0xff]
    %v73 = vld [vmem:[#allocation5 + $0x78] sm:$0xff]
    %v74 = vld [vmem:[#allocation5 + $0x80] sm:$0xff]
    %v75 = vld [vmem:[#allocation5 + $0x88] sm:$0xff]
    %v76 = vld [vmem:[#allocation5 + $0x90] sm:$0xff]
    %v77 = vld [vmem:[#allocation5 + $0x98] sm:$0xff]
    %v78 = vld [vmem:[#allocation5 + $0xa0] sm:$0xff]
    %v79 = vld [vmem:[#allocation5 + $0xa8] sm:$0xff]
    %v80 = vld [vmem:[#allocation5 + $0xb0] sm:$0xff]
    %v81 = vld [vmem:[#allocation5 + $0xb8] sm:$0xff]
    %v82 = vld [vmem:[#allocation5 + $0xc0] sm:$0xff]
    %v83 = vld [vmem:[#allocation5 + $0xc8] sm:$0xff]
    %v84 = vld [vmem:[#allocation5 + $0xd0] sm:$0xff]
    %v85 = vld [vmem:[#allocation5 + $0xd8] sm:$0xff]
    %v86 = vld [vmem:[#allocation5 + $0xe0] sm:$0xff]
    %v87 = vld [vmem:[#allocation5 + $0xe8] sm:$0xff]
    %v88 = vld [vmem:[#allocation5 + $0xf0] sm:$0xff]
    %v89 = vld [vmem:[#allocation5 + $0xf8] sm:$0xff]
    %v90 = vld [vmem:[#allocation5 + $0x100] sm:$0xff]
    %v91 = vld [vmem:[#allocation5 + $0x108] sm:$0xff]
    %v92 = vld [vmem:[#allocation5 + $0x110] sm:$0xff]
    %v93 = vld [vmem:[#allocation5 + $0x118] sm:$0xff]
    %v94 = vld [vmem:[#allocation5 + $0x120] sm:$0xff]
    %v95 = vld [vmem:[#allocation5 + $0x128] sm:$0xff]
    %v96 = vld [vmem:[#allocation5 + $0x130] sm:$0xff]
    %v97 = vld [vmem:[#allocation5 + $0x138] sm:$0xff]
    %v98 = vld [vmem:[#allocation5 + $0x140] sm:$0xff]
    %v99 = vld [vmem:[#allocation5 + $0x148] sm:$0xff]
    %v100 = vld [vmem:[#allocation5 + $0x150] sm:$0xff]
    %v101 = vld [vmem:[#allocation5 + $0x158] sm:$0xff]
    %v102 = vld [vmem:[#allocation5 + $0x160] sm:$0xff]
    %v103 = vld [vmem:[#allocation5 + $0x168] sm:$0xff]
    %v104 = vld [vmem:[#allocation5 + $0x170] sm:$0xff]
    %v105 = vld [vmem:[#allocation5 + $0x178] sm:$0xff]
    %106 = vmatprep.subr.mxu0 %v104
    %107 = vmatpush1.msra.mxu0 %v103
    %108 = vmatprep.subr.mxu0 %v101
    %109 = vmatpush1.msra.mxu0 %v100
    %110 = vmatprep.subr.mxu0 %v98
    %111 = vmatpush1.msra.mxu0 %v97
    %112 = vmatprep.subr.mxu0 %v95
    %113 = vmatpush1.msra.mxu0 %v94
    %114 = vmatprep.subr.mxu0 %v92
    %115 = vmatpush1.msra.mxu0 %v91
    %116 = vmatprep.subr.mxu0 %v89
    %117 = vmatpush1.msra.mxu0 %v88
    %118 = vmatprep.subr.mxu0 %v86
    %119 = vmatpush1.msra.mxu0 %v85
    %120 = vmatprep.subr.mxu0 %v83
    %121 = vmatpush1.msra.mxu0 %v82
    %122 = vmatprep.subr.mxu0 %v80
    %123 = vmatpush1.msra.mxu0 %v79
    %124 = vmatprep.subr.mxu0 %v77
    %125 = vmatpush1.msra.mxu0 %v76
    %126 = vmatprep.subr.mxu0 %v74
    %127 = vmatpush1.msra.mxu0 %v73
    %128 = vmatprep.subr.mxu0 %v71
    %129 = vmatpush1.msra.mxu0 %v70
    %130 = vmatprep.subr.mxu0 %v68
    %131 = vmatpush1.msra.mxu0 %v67
    %132 = vmatprep.subr.mxu0 %v65
    %133 = vmatpush1.msra.mxu0 %v64
    %134 = vmatprep.subr.mxu0 %v62
    %135 = vmatpush1.msra.mxu0 %v61
    %136 = vmatprep.subr.mxu0 %v59
    %137 = vmatpush1.msra.mxu0 %v58
    %138 = vmatprep.subr.mxu0 0.0
    %139 = vmatpush2.msra.mxu0 0.0
    %140 = vmatprep.subr.mxu0 0.0
    %141 = vmatpush2.msra.mxu0 0.0
    %142 = vmatprep.subr.mxu0 0.0
    %143 = vmatpush2.msra.mxu0 0.0
    %144 = vmatprep.subr.mxu0 0.0
    %145 = vmatpush2.msra.mxu0 0.0
    %146 = vmatprep.subr.mxu0 0.0
    %147 = vmatpush2.msra.mxu0 0.0
    %148 = vmatprep.subr.mxu0 0.0
    %149 = vmatpush2.msra.mxu0 0.0
    %150 = vmatprep.subr.mxu0 0.0
    %151 = vmatpush2.msra.mxu0 0.0
    %152 = vmatprep.subr.mxu0 0.0
    %153 = vmatpush2.msra.mxu0 0.0
    %154 = vmatprep.subr.mxu0 0.0
    %155 = vmatpush2.msra.mxu0 0.0
    %156 = vmatprep.subr.mxu0 0.0
    %157 = vmatpush2.msra.mxu0 0.0
    %158 = vmatprep.subr.mxu0 0.0
    %159 = vmatpush2.msra.mxu0 0.0
    %160 = vmatprep.subr.mxu0 0.0
    %161 = vmatpush2.msra.mxu0 0.0
    %162 = vmatprep.subr.mxu0 0.0
    %163 = vmatpush2.msra.mxu0 0.0
    %164 = vmatprep.subr.mxu0 0.0
    %165 = vmatpush2.msra.mxu0 0.0
    %166 = vmatprep.subr.mxu0 0.0
    %167 = vmatpush2.msra.mxu0 0.0
    %168 = vmatprep.subr.mxu0 0.0
    %169 = vmatpush2.msra.mxu0 0.0
    %170 = vmatprep.mubr.f32.mxu0 0.0
    %171 = vmatmul.mubr.f32.gmra.mxu0 %v56
    %v172 = vpop.f32.mrf.mxu0
    %v173 = vadd.f32 0.0, %v172
    %v174 = vpop.f32.mrf.mxu0
    %v175 = vadd.f32 0.0, %v174
    %176 = vmatprep.mubr.f32.mxu0 0.0
    %177 = vmatmul.mubr.f32.gmra.mxu0 %v57
    %v178 = vpop.f32.mrf.mxu0
    %v179 = vadd.f32 0.0, %v178
    %v180 = vpop.f32.mrf.mxu0
    %v181 = vadd.f32 0.0, %v180
    %182 = vdwg.mxu0
    %183 = vmatprep.subr.mxu0 0.0
    %184 = vmatpush1.msra.mxu0 %v105
    %185 = vmatprep.subr.mxu0 0.0
    %186 = vmatpush1.msra.mxu0 %v102
    %187 = vmatprep.subr.mxu0 0.0
    %188 = vmatpush1.msra.mxu0 %v99
    %189 = vmatprep.subr.mxu0 0.0
    %190 = vmatpush1.msra.mxu0 %v96
    %191 = vmatprep.subr.mxu0 0.0
    %192 = vmatpush1.msra.mxu0 %v93
    %193 = vmatprep.subr.mxu0 0.0
    %194 = vmatpush1.msra.mxu0 %v90
    %195 = vmatprep.subr.mxu0 0.0
    %196 = vmatpush1.msra.mxu0 %v87
    %197 = vmatprep.subr.mxu0 0.0
    %198 = vmatpush1.msra.mxu0 %v84
    %199 = vmatprep.subr.mxu0 0.0
    %200 = vmatpush1.msra.mxu0 %v81
    %201 = vmatprep.subr.mxu0 0.0
    %202 = vmatpush1.msra.mxu0 %v78
    %203 = vmatprep.subr.mxu0 0.0
    %204 = vmatpush1.msra.mxu0 %v75
    %205 = vmatprep.subr.mxu0 0.0
    %206 = vmatpush1.msra.mxu0 %v72
    %207 = vmatprep.subr.mxu0 0.0
    %208 = vmatpush1.msra.mxu0 %v69
    %209 = vmatprep.subr.mxu0 0.0
    %210 = vmatpush1.msra.mxu0 %v66
    %211 = vmatprep.subr.mxu0 0.0
    %212 = vmatpush1.msra.mxu0 %v63
    %213 = vmatprep.subr.mxu0 0.0
    %214 = vmatpush1.msra.mxu0 %v60
    %215 = vmatprep.subr.mxu0 0.0
    %216 = vmatpush2.msra.mxu0 0.0
    %217 = vmatprep.subr.mxu0 0.0
    %218 = vmatpush2.msra.mxu0 0.0
    %219 = vmatprep.subr.mxu0 0.0
    %220 = vmatpush2.msra.mxu0 0.0
    %221 = vmatprep.subr.mxu0 0.0
    %222 = vmatpush2.msra.mxu0 0.0
    %223 = vmatprep.subr.mxu0 0.0
    %224 = vmatpush2.msra.mxu0 0.0
    %225 = vmatprep.subr.mxu0 0.0
    %226 = vmatpush2.msra.mxu0 0.0
    %227 = vmatprep.subr.mxu0 0.0
    %228 = vmatpush2.msra.mxu0 0.0
    %229 = vmatprep.subr.mxu0 0.0
    %230 = vmatpush2.msra.mxu0 0.0
    %231 = vmatprep.subr.mxu0 0.0
    %232 = vmatpush2.msra.mxu0 0.0
    %233 = vmatprep.subr.mxu0 0.0
    %234 = vmatpush2.msra.mxu0 0.0
    %235 = vmatprep.subr.mxu0 0.0
    %236 = vmatpush2.msra.mxu0 0.0
    %237 = vmatprep.subr.mxu0 0.0
    %238 = vmatpush2.msra.mxu0 0.0
    %239 = vmatprep.subr.mxu0 0.0
    %240 = vmatpush2.msra.mxu0 0.0
    %241 = vmatprep.subr.mxu0 0.0
    %242 = vmatpush2.msra.mxu0 0.0
    %243 = vmatprep.subr.mxu0 0.0
    %244 = vmatpush2.msra.mxu0 0.0
    %245 = vmatprep.subr.mxu0 0.0
    %246 = vmatpush2.msra.mxu0 0.0
    %247 = vmatprep.mubr.f32.mxu0 0.0
    %248 = vmatmul.mubr.f32.gmra.mxu0 %v56
    %v249 = vpop.f32.mrf.mxu0
    %v250 = vadd.f32 0.0, %v249
    %v251 = vpop.f32.mrf.mxu0
    %252 = vmatprep.mubr.f32.mxu0 0.0
    %253 = vmatmul.mubr.f32.gmra.mxu0 %v57
    %v254 = vpop.f32.mrf.mxu0
    %v255 = vadd.f32 0.0, %v254
    %v256 = vpop.f32.mrf.mxu0
    %257 = vdwg.mxu0
    %s258 = scalar_lea.vmem [#allocation5], 384
    %v259 = vld [vmem:[%s258] sm:$0xff]
    %v260 = vld [vmem:[%s258 + $0x8] sm:$0xff]
    %v261 = vld [vmem:[%s258 + $0x10] sm:$0xff]
    %v262 = vld [vmem:[%s258 + $0x18] sm:$0xff]
    %v263 = vld [vmem:[%s258 + $0x20] sm:$0xff]
    %v264 = vld [vmem:[%s258 + $0x28] sm:$0xff]
    %v265 = vld [vmem:[%s258 + $0x30] sm:$0xff]
    %v266 = vld [vmem:[%s258 + $0x38] sm:$0xff]
    %v267 = vld [vmem:[%s258 + $0x40] sm:$0xff]
    %v268 = vld [vmem:[%s258 + $0x48] sm:$0xff]
    %v269 = vld [vmem:[%s258 + $0x50] sm:$0xff]
    %v270 = vld [vmem:[%s258 + $0x58] sm:$0xff]
    %v271 = vld [vmem:[%s258 + $0x60] sm:$0xff]
    %v272 = vld [vmem:[%s258 + $0x68] sm:$0xff]
    %v273 = vld [vmem:[%s258 + $0x70] sm:$0xff]
    %v274 = vld [vmem:[%s258 + $0x78] sm:$0xff]
    %v275 = vld [vmem:[%s258 + $0x80] sm:$0xff]
    %v276 = vld [vmem:[%s258 + $0x88] sm:$0xff]
    %v277 = vld [vmem:[%s258 + $0x90] sm:$0xff]
    %v278 = vld [vmem:[%s258 + $0x98] sm:$0xff]
    %v279 = vld [vmem:[%s258 + $0xa0] sm:$0xff]
    %v280 = vld [vmem:[%s258 + $0xa8] sm:$0xff]
    %v281 = vld [vmem:[%s258 + $0xb0] sm:$0xff]
    %v282 = vld [vmem:[%s258 + $0xb8] sm:$0xff]
    %v283 = vld [vmem:[%s258 + $0xc0] sm:$0xff]
    %v284 = vld [vmem:[%s258 + $0xc8] sm:$0xff]
    %v285 = vld [vmem:[%s258 + $0xd0] sm:$0xff]
    %v286 = vld [vmem:[%s258 + $0xd8] sm:$0xff]
    %v287 = vld [vmem:[%s258 + $0xe0] sm:$0xff]
    %v288 = vld [vmem:[%s258 + $0xe8] sm:$0xff]
    %v289 = vld [vmem:[%s258 + $0xf0] sm:$0xff]
    %v290 = vld [vmem:[%s258 + $0xf8] sm:$0xff]
    %v291 = vld [vmem:[%s258 + $0x100] sm:$0xff]
    %v292 = vld [vmem:[%s258 + $0x108] sm:$0xff]
    %v293 = vld [vmem:[%s258 + $0x110] sm:$0xff]
    %v294 = vld [vmem:[%s258 + $0x118] sm:$0xff]
    %v295 = vld [vmem:[%s258 + $0x120] sm:$0xff]
    %v296 = vld [vmem:[%s258 + $0x128] sm:$0xff]
    %v297 = vld [vmem:[%s258 + $0x130] sm:$0xff]
    %v298 = vld [vmem:[%s258 + $0x138] sm:$0xff]
    %v299 = vld [vmem:[%s258 + $0x140] sm:$0xff]
    %v300 = vld [vmem:[%s258 + $0x148] sm:$0xff]
    %v301 = vld [vmem:[%s258 + $0x150] sm:$0xff]
    %v302 = vld [vmem:[%s258 + $0x158] sm:$0xff]
    %v303 = vld [vmem:[%s258 + $0x160] sm:$0xff]
    %v304 = vld [vmem:[%s258 + $0x168] sm:$0xff]
    %v305 = vld [vmem:[%s258 + $0x170] sm:$0xff]
    %v306 = vld [vmem:[%s258 + $0x178] sm:$0xff]
    %307 = vmatprep.subr.mxu0 %v305
    %308 = vmatpush1.msra.mxu0 %v304
    %309 = vmatprep.subr.mxu0 %v302
    %310 = vmatpush1.msra.mxu0 %v301
    %311 = vmatprep.subr.mxu0 %v299
    %312 = vmatpush1.msra.mxu0 %v298
    %313 = vmatprep.subr.mxu0 %v296
    %314 = vmatpush1.msra.mxu0 %v295
    %315 = vmatprep.subr.mxu0 %v293
    %316 = vmatpush1.msra.mxu0 %v292
    %317 = vmatprep.subr.mxu0 %v290
    %318 = vmatpush1.msra.mxu0 %v289
    %319 = vmatprep.subr.mxu0 %v287
    %320 = vmatpush1.msra.mxu0 %v286
    %321 = vmatprep.subr.mxu0 %v284
    %322 = vmatpush1.msra.mxu0 %v283
    %323 = vmatprep.subr.mxu0 %v281
    %324 = vmatpush1.msra.mxu0 %v280
    %325 = vmatprep.subr.mxu0 %v278
    %326 = vmatpush1.msra.mxu0 %v277
    %327 = vmatprep.subr.mxu0 %v275
    %328 = vmatpush1.msra.mxu0 %v274
    %329 = vmatprep.subr.mxu0 %v272
    %330 = vmatpush1.msra.mxu0 %v271
    %331 = vmatprep.subr.mxu0 %v269
    %332 = vmatpush1.msra.mxu0 %v268
    %333 = vmatprep.subr.mxu0 %v266
    %334 = vmatpush1.msra.mxu0 %v265
    %335 = vmatprep.subr.mxu0 %v263
    %336 = vmatpush1.msra.mxu0 %v262
    %337 = vmatprep.subr.mxu0 %v260
    %338 = vmatpush1.msra.mxu0 %v259
    %339 = vmatprep.subr.mxu0 0.0
    %340 = vmatpush2.msra.mxu0 0.0
    %341 = vmatprep.subr.mxu0 0.0
    %342 = vmatpush2.msra.mxu0 0.0
    %343 = vmatprep.subr.mxu0 0.0
    %344 = vmatpush2.msra.mxu0 0.0
    %345 = vmatprep.subr.mxu0 0.0
    %346 = vmatpush2.msra.mxu0 0.0
    %347 = vmatprep.subr.mxu0 0.0
    %348 = vmatpush2.msra.mxu0 0.0
    %349 = vmatprep.subr.mxu0 0.0
    %350 = vmatpush2.msra.mxu0 0.0
    %351 = vmatprep.subr.mxu0 0.0
    %352 = vmatpush2.msra.mxu0 0.0
    %353 = vmatprep.subr.mxu0 0.0
    %354 = vmatpush2.msra.mxu0 0.0
    %355 = vmatprep.subr.mxu0 0.0
    %356 = vmatpush2.msra.mxu0 0.0
    %357 = vmatprep.subr.mxu0 0.0
    %358 = vmatpush2.msra.mxu0 0.0
    %359 = vmatprep.subr.mxu0 0.0
    %360 = vmatpush2.msra.mxu0 0.0
    %361 = vmatprep.subr.mxu0 0.0
    %362 = vmatpush2.msra.mxu0 0.0
    %363 = vmatprep.subr.mxu0 0.0
    %364 = vmatpush2.msra.mxu0 0.0
    %365 = vmatprep.subr.mxu0 0.0
    %366 = vmatpush2.msra.mxu0 0.0
    %367 = vmatprep.subr.mxu0 0.0
    %368 = vmatpush2.msra.mxu0 0.0
    %369 = vmatprep.subr.mxu0 0.0
    %370 = vmatpush2.msra.mxu0 0.0
    %371 = vmatprep.mubr.f32.mxu0 0.0
    %372 = vmatmul.mubr.f32.gmra.mxu0 %v56
    %v373 = vpop.f32.mrf.mxu0
    %v374 = vadd.f32 0.0, %v373
    %v375 = vpop.f32.mrf.mxu0
    %v376 = vadd.f32 0.0, %v375
    %377 = vmatprep.mubr.f32.mxu0 0.0
    %378 = vmatmul.mubr.f32.gmra.mxu0 %v57
    %v379 = vpop.f32.mrf.mxu0
    %v380 = vadd.f32 0.0, %v379
    %v381 = vpop.f32.mrf.mxu0
    %v382 = vadd.f32 0.0, %v381
    %383 = vdwg.mxu0
    %384 = vmatprep.subr.mxu0 0.0
    %385 = vmatpush1.msra.mxu0 %v306
    %386 = vmatprep.subr.mxu0 0.0
    %387 = vmatpush1.msra.mxu0 %v303
    %388 = vmatprep.subr.mxu0 0.0
    %389 = vmatpush1.msra.mxu0 %v300
    %390 = vmatprep.subr.mxu0 0.0
    %391 = vmatpush1.msra.mxu0 %v297
    %392 = vmatprep.subr.mxu0 0.0
    %393 = vmatpush1.msra.mxu0 %v294
    %394 = vmatprep.subr.mxu0 0.0
    %395 = vmatpush1.msra.mxu0 %v291
    %396 = vmatprep.subr.mxu0 0.0
    %397 = vmatpush1.msra.mxu0 %v288
    %398 = vmatprep.subr.mxu0 0.0
    %399 = vmatpush1.msra.mxu0 %v285
    %400 = vmatprep.subr.mxu0 0.0
    %401 = vmatpush1.msra.mxu0 %v282
    %402 = vmatprep.subr.mxu0 0.0
    %403 = vmatpush1.msra.mxu0 %v279
    %404 = vmatprep.subr.mxu0 0.0
    %405 = vmatpush1.msra.mxu0 %v276
    %406 = vmatprep.subr.mxu0 0.0
    %407 = vmatpush1.msra.mxu0 %v273
    %408 = vmatprep.subr.mxu0 0.0
    %409 = vmatpush1.msra.mxu0 %v270
    %410 = vmatprep.subr.mxu0 0.0
    %411 = vmatpush1.msra.mxu0 %v267
    %412 = vmatprep.subr.mxu0 0.0
    %413 = vmatpush1.msra.mxu0 %v264
    %414 = vmatprep.subr.mxu0 0.0
    %415 = vmatpush1.msra.mxu0 %v261
    %416 = vmatprep.subr.mxu0 0.0
    %417 = vmatpush2.msra.mxu0 0.0
    %418 = vmatprep.subr.mxu0 0.0
    %419 = vmatpush2.msra.mxu0 0.0
    %420 = vmatprep.subr.mxu0 0.0
    %421 = vmatpush2.msra.mxu0 0.0
    %422 = vmatprep.subr.mxu0 0.0
    %423 = vmatpush2.msra.mxu0 0.0
    %424 = vmatprep.subr.mxu0 0.0
    %425 = vmatpush2.msra.mxu0 0.0
    %426 = vmatprep.subr.mxu0 0.0
    %427 = vmatpush2.msra.mxu0 0.0
    %428 = vmatprep.subr.mxu0 0.0
    %429 = vmatpush2.msra.mxu0 0.0
    %430 = vmatprep.subr.mxu0 0.0
    %431 = vmatpush2.msra.mxu0 0.0
    %432 = vmatprep.subr.mxu0 0.0
    %433 = vmatpush2.msra.mxu0 0.0
    %434 = vmatprep.subr.mxu0 0.0
    %435 = vmatpush2.msra.mxu0 0.0
    %436 = vmatprep.subr.mxu0 0.0
    %437 = vmatpush2.msra.mxu0 0.0
    %438 = vmatprep.subr.mxu0 0.0
    %439 = vmatpush2.msra.mxu0 0.0
    %440 = vmatprep.subr.mxu0 0.0
    %441 = vmatpush2.msra.mxu0 0.0
    %442 = vmatprep.subr.mxu0 0.0
    %443 = vmatpush2.msra.mxu0 0.0
    %444 = vmatprep.subr.mxu0 0.0
    %445 = vmatpush2.msra.mxu0 0.0
    %446 = vmatprep.subr.mxu0 0.0
    %447 = vmatpush2.msra.mxu0 0.0
    %448 = vmatprep.mubr.f32.mxu0 0.0
    %449 = vmatmul.mubr.f32.gmra.mxu0 %v56
    %v450 = vpop.f32.mrf.mxu0
    %v451 = vadd.f32 0.0, %v450
    %v452 = vpop.f32.mrf.mxu0
    %453 = vmatprep.mubr.f32.mxu0 0.0
    %454 = vmatmul.mubr.f32.gmra.mxu0 %v57
    %v455 = vpop.f32.mrf.mxu0
    %v456 = vadd.f32 0.0, %v455
    %v457 = vpop.f32.mrf.mxu0
    %458 = vdwg.mxu0
    %v459 = vxor.u32 %v173, 2147483648
    %v460 = vxor.u32 %v175, 2147483648
    %v461 = vxor.u32 %v250, 2147483648
    %v462 = vxor.u32 %v179, 2147483648
    %v463 = vxor.u32 %v181, 2147483648
    %v464 = vxor.u32 %v255, 2147483648
    %v465 = vmul.f32 %v459, 1.442695
    %v466 = vpow.pop %v465
    %v467 = vmul.f32 %v460, 1.442695
    %v468 = vpow.pop %v467
    %v469 = vmul.f32 %v461, 1.442695
    %v470 = vpow.pop %v469
    %v471 = vmul.f32 %v462, 1.442695
    %v472 = vpow.pop %v471
    %v473 = vmul.f32 %v463, 1.442695
    %v474 = vpow.pop %v473
    %v475 = vmul.f32 %v464, 1.442695
    %v476 = vpow.pop %v475
    %v477 = vadd.f32 %v466, 1.0
    %v478 = vadd.f32 %v468, 1.0
    %v479 = vadd.f32 %v470, 1.0
    %v480 = vadd.f32 %v472, 1.0
    %v481 = vadd.f32 %v474, 1.0
    %v482 = vadd.f32 %v476, 1.0
    %v483 = vrcp.pop %v477
    %v484 = vmul.f32 1.0, %v483
    %v485 = vrcp.pop %v478
    %v486 = vmul.f32 1.0, %v485
    %v487 = vrcp.pop %v479
    %v488 = vmul.f32 1.0, %v487
    %v489 = vrcp.pop %v480
    %v490 = vmul.f32 1.0, %v489
    %v491 = vrcp.pop %v481
    %v492 = vmul.f32 1.0, %v491
    %v493 = vrcp.pop %v482
    %v494 = vmul.f32 1.0, %v493
    %v495 = vmul.f32 %v173, %v484
    %v496 = vmul.f32 %v175, %v486
    %v497 = vmul.f32 %v250, %v488
    %v498 = vmul.f32 %v179, %v490
    %v499 = vmul.f32 %v181, %v492
    %v500 = vmul.f32 %v255, %v494
    %v501 = vmul.f32 %v495, %v374
    %v502 = vmul.f32 %v496, %v376
    %v503 = vmul.f32 %v497, %v451
    %v504 = vmul.f32 %v498, %v380
    %v505 = vmul.f32 %v499, %v382
    %v506 = vmul.f32 %v500, %v456
    %v507 = vld [vmem:[#allocation7] sm:$0xff]
    %v508 = vld [vmem:[#allocation7 + $0x8] sm:$0xff]
    %v509 = vld [vmem:[#allocation7 + $0x10] sm:$0xff]
    %v510 = vld [vmem:[#allocation7 + $0x18] sm:$0xff]
    %v511 = vld [vmem:[#allocation7 + $0x20] sm:$0xff]
    %v512 = vld [vmem:[#allocation7 + $0x28] sm:$0xff]
    %v513 = vld [vmem:[#allocation7 + $0x30] sm:$0xff]
    %v514 = vld [vmem:[#allocation7 + $0x38] sm:$0xff]
    %v515 = vld [vmem:[#allocation7 + $0x40] sm:$0xff]
    %v516 = vld [vmem:[#allocation7 + $0x48] sm:$0xff]
    %v517 = vld [vmem:[#allocation7 + $0x50] sm:$0xff]
    %v518 = vld [vmem:[#allocation7 + $0x58] sm:$0xff]
    %v519 = vld [vmem:[#allocation7 + $0x60] sm:$0xff]
    %v520 = vld [vmem:[#allocation7 + $0x68] sm:$0xff]
    %v521 = vld [vmem:[#allocation7 + $0x70] sm:$0xff]
    %v522 = vld [vmem:[#allocation7 + $0x78] sm:$0xff]
    %v523 = vld [vmem:[#allocation7 + $0x80] sm:$0xff]
    %v524 = vld [vmem:[#allocation7 + $0x88] sm:$0xff]
    %v525 = vld [vmem:[#allocation7 + $0x90] sm:$0xff]
    %v526 = vld [vmem:[#allocation7 + $0x98] sm:$0xff]
    %v527 = vld [vmem:[#allocation7 + $0xa0] sm:$0xff]
    %v528 = vld [vmem:[#allocation7 + $0xa8] sm:$0xff]
    %v529 = vld [vmem:[#allocation7 + $0xb0] sm:$0xff]
    %v530 = vld [vmem:[#allocation7 + $0xb8] sm:$0xff]
    %v531 = vld [vmem:[#allocation7 + $0xc0] sm:$0xff]
    %v532 = vld [vmem:[#allocation7 + $0xc8] sm:$0xff]
    %v533 = vld [vmem:[#allocation7 + $0xd0] sm:$0xff]
    %v534 = vld [vmem:[#allocation7 + $0xd8] sm:$0xff]
    %v535 = vld [vmem:[#allocation7 + $0xe0] sm:$0xff]
    %v536 = vld [vmem:[#allocation7 + $0xe8] sm:$0xff]
    %v537 = vld [vmem:[#allocation7 + $0xf0] sm:$0xff]
    %v538 = vld [vmem:[#allocation7 + $0xf8] sm:$0xff]
    %v539 = vld [vmem:[#allocation7 + $0x100] sm:$0xff]
    %v540 = vld [vmem:[#allocation7 + $0x108] sm:$0xff]
    %v541 = vld [vmem:[#allocation7 + $0x110] sm:$0xff]
    %v542 = vld [vmem:[#allocation7 + $0x118] sm:$0xff]
    %v543 = vld [vmem:[#allocation7 + $0x120] sm:$0xff]
    %v544 = vld [vmem:[#allocation7 + $0x128] sm:$0xff]
    %v545 = vld [vmem:[#allocation7 + $0x130] sm:$0xff]
    %v546 = vld [vmem:[#allocation7 + $0x138] sm:$0xff]
    %v547 = vld [vmem:[#allocation7 + $0x140] sm:$0xff]
    %v548 = vld [vmem:[#allocation7 + $0x148] sm:$0xff]
    %v549 = vld [vmem:[#allocation7 + $0x150] sm:$0xff]
    %v550 = vld [vmem:[#allocation7 + $0x158] sm:$0xff]
    %v551 = vld [vmem:[#allocation7 + $0x160] sm:$0xff]
    %v552 = vld [vmem:[#allocation7 + $0x168] sm:$0xff]
    %v553 = vld [vmem:[#allocation7 + $0x170] sm:$0xff]
    %v554 = vld [vmem:[#allocation7 + $0x178] sm:$0xff]
    %555 = vmatprep.subr.mxu0 0.0
    %556 = vmatpush1.msra.mxu0 %v522
    %557 = vmatprep.subr.mxu0 0.0
    %558 = vmatpush1.msra.mxu0 %v521
    %559 = vmatprep.subr.mxu0 0.0
    %560 = vmatpush1.msra.mxu0 %v520
    %561 = vmatprep.subr.mxu0 0.0
    %562 = vmatpush1.msra.mxu0 %v519
    %563 = vmatprep.subr.mxu0 0.0
    %564 = vmatpush1.msra.mxu0 %v518
    %565 = vmatprep.subr.mxu0 0.0
    %566 = vmatpush1.msra.mxu0 %v517
    %567 = vmatprep.subr.mxu0 0.0
    %568 = vmatpush1.msra.mxu0 %v516
    %569 = vmatprep.subr.mxu0 0.0
    %570 = vmatpush1.msra.mxu0 %v515
    %571 = vmatprep.subr.mxu0 0.0
    %572 = vmatpush1.msra.mxu0 %v514
    %573 = vmatprep.subr.mxu0 0.0
    %574 = vmatpush1.msra.mxu0 %v513
    %575 = vmatprep.subr.mxu0 0.0
    %576 = vmatpush1.msra.mxu0 %v512
    %577 = vmatprep.subr.mxu0 0.0
    %578 = vmatpush1.msra.mxu0 %v511
    %579 = vmatprep.subr.mxu0 0.0
    %580 = vmatpush1.msra.mxu0 %v510
    %581 = vmatprep.subr.mxu0 0.0
    %582 = vmatpush1.msra.mxu0 %v509
    %583 = vmatprep.subr.mxu0 0.0
    %584 = vmatpush1.msra.mxu0 %v508
    %585 = vmatprep.subr.mxu0 0.0
    %586 = vmatpush1.msra.mxu0 %v507
    %587 = vmatprep.subr.mxu0 0.0
    %588 = vmatpush2.msra.mxu0 %v538
    %589 = vmatprep.subr.mxu0 0.0
    %590 = vmatpush2.msra.mxu0 %v537
    %591 = vmatprep.subr.mxu0 0.0
    %592 = vmatpush2.msra.mxu0 %v536
    %593 = vmatprep.subr.mxu0 0.0
    %594 = vmatpush2.msra.mxu0 %v535
    %595 = vmatprep.subr.mxu0 0.0
    %596 = vmatpush2.msra.mxu0 %v534
    %597 = vmatprep.subr.mxu0 0.0
    %598 = vmatpush2.msra.mxu0 %v533
    %599 = vmatprep.subr.mxu0 0.0
    %600 = vmatpush2.msra.mxu0 %v532
    %601 = vmatprep.subr.mxu0 0.0
    %602 = vmatpush2.msra.mxu0 %v531
    %603 = vmatprep.subr.mxu0 0.0
    %604 = vmatpush2.msra.mxu0 %v530
    %605 = vmatprep.subr.mxu0 0.0
    %606 = vmatpush2.msra.mxu0 %v529
    %607 = vmatprep.subr.mxu0 0.0
    %608 = vmatpush2.msra.mxu0 %v528
    %609 = vmatprep.subr.mxu0 0.0
    %610 = vmatpush2.msra.mxu0 %v527
    %611 = vmatprep.subr.mxu0 0.0
    %612 = vmatpush2.msra.mxu0 %v526
    %613 = vmatprep.subr.mxu0 0.0
    %614 = vmatpush2.msra.mxu0 %v525
    %615 = vmatprep.subr.mxu0 0.0
    %616 = vmatpush2.msra.mxu0 %v524
    %617 = vmatprep.subr.mxu0 0.0
    %618 = vmatpush2.msra.mxu0 %v523
    %619 = vmatprep.mubr.f32.mxu0 %v502
    %620 = vmatmul.mubr.f32.gmra.mxu0 %v501
    %v621 = vpop.f32.mrf.mxu0
    %v622 = vadd.f32 0.0, %v621
    %v623 = vpop.f32.mrf.mxu0
    %624 = vmatprep.mubr.f32.mxu0 %v505
    %625 = vmatmul.mubr.f32.gmra.mxu0 %v504
    %v626 = vpop.f32.mrf.mxu0
    %v627 = vadd.f32 0.0, %v626
    %v628 = vpop.f32.mrf.mxu0
    %629 = vdwg.mxu0
    %630 = vmatprep.subr.mxu0 0.0
    %631 = vmatpush1.msra.mxu0 %v554
    %632 = vmatprep.subr.mxu0 0.0
    %633 = vmatpush1.msra.mxu0 %v553
    %634 = vmatprep.subr.mxu0 0.0
    %635 = vmatpush1.msra.mxu0 %v552
    %636 = vmatprep.subr.mxu0 0.0
    %637 = vmatpush1.msra.mxu0 %v551
    %638 = vmatprep.subr.mxu0 0.0
    %639 = vmatpush1.msra.mxu0 %v550
    %640 = vmatprep.subr.mxu0 0.0
    %641 = vmatpush1.msra.mxu0 %v549
    %642 = vmatprep.subr.mxu0 0.0
    %643 = vmatpush1.msra.mxu0 %v548
    %644 = vmatprep.subr.mxu0 0.0
    %645 = vmatpush1.msra.mxu0 %v547
    %646 = vmatprep.subr.mxu0 0.0
    %647 = vmatpush1.msra.mxu0 %v546
    %648 = vmatprep.subr.mxu0 0.0
    %649 = vmatpush1.msra.mxu0 %v545
    %650 = vmatprep.subr.mxu0 0.0
    %651 = vmatpush1.msra.mxu0 %v544
    %652 = vmatprep.subr.mxu0 0.0
    %653 = vmatpush1.msra.mxu0 %v543
    %654 = vmatprep.subr.mxu0 0.0
    %655 = vmatpush1.msra.mxu0 %v542
    %656 = vmatprep.subr.mxu0 0.0
    %657 = vmatpush1.msra.mxu0 %v541
    %658 = vmatprep.subr.mxu0 0.0
    %659 = vmatpush1.msra.mxu0 %v540
    %660 = vmatprep.subr.mxu0 0.0
    %661 = vmatpush1.msra.mxu0 %v539
    %662 = vmatprep.subr.mxu0 0.0
    %663 = vmatpush2.msra.mxu0 0.0
    %664 = vmatprep.subr.mxu0 0.0
    %665 = vmatpush2.msra.mxu0 0.0
    %666 = vmatprep.subr.mxu0 0.0
    %667 = vmatpush2.msra.mxu0 0.0
    %668 = vmatprep.subr.mxu0 0.0
    %669 = vmatpush2.msra.mxu0 0.0
    %670 = vmatprep.subr.mxu0 0.0
    %671 = vmatpush2.msra.mxu0 0.0
    %672 = vmatprep.subr.mxu0 0.0
    %673 = vmatpush2.msra.mxu0 0.0
    %674 = vmatprep.subr.mxu0 0.0
    %675 = vmatpush2.msra.mxu0 0.0
    %676 = vmatprep.subr.mxu0 0.0
    %677 = vmatpush2.msra.mxu0 0.0
    %678 = vmatprep.subr.mxu0 0.0
    %679 = vmatpush2.msra.mxu0 0.0
    %680 = vmatprep.subr.mxu0 0.0
    %681 = vmatpush2.msra.mxu0 0.0
    %682 = vmatprep.subr.mxu0 0.0
    %683 = vmatpush2.msra.mxu0 0.0
    %684 = vmatprep.subr.mxu0 0.0
    %685 = vmatpush2.msra.mxu0 0.0
    %686 = vmatprep.subr.mxu0 0.0
    %687 = vmatpush2.msra.mxu0 0.0
    %688 = vmatprep.subr.mxu0 0.0
    %689 = vmatpush2.msra.mxu0 0.0
    %690 = vmatprep.subr.mxu0 0.0
    %691 = vmatpush2.msra.mxu0 0.0
    %692 = vmatprep.subr.mxu0 0.0
    %693 = vmatpush2.msra.mxu0 0.0
    %694 = vmatprep.mubr.f32.mxu0 0.0
    %695 = vmatmul.mubr.f32.gmra.mxu0 %v503
    %v696 = vpop.f32.mrf.mxu0
    %v697 = vadd.f32 %v622, %v696
    %v698 = vpop.f32.mrf.mxu0
    %699 = vmatprep.mubr.f32.mxu0 0.0
    %700 = vmatmul.mubr.f32.gmra.mxu0 %v506
    %v701 = vpop.f32.mrf.mxu0
    %v702 = vadd.f32 %v627, %v701
    %v703 = vpop.f32.mrf.mxu0
    %704 = vdwg.mxu0
    %705 = vst [vmem:[#allocation8] sm:$0xff] %v697
    %706 = vst [vmem:[#allocation8 + $0x8] sm:$0xff] %v702
    // Predicated region
    $region26: #{tpu_custom_call.1} parent=1 // pred_check
      _
    $region27: #{tpu_custom_call.1} parent=1 // pred_check_branch
      %708 = sbr.rel (0) target = $region29
    $region28: #{tpu_custom_call.1} parent=1 // pred_region
      %s710 = ssub.s32 256, 256
      %711 = vsyncadd [#allocation4], %s710
      %s712 = sshll.u32 [#allocation8], 4
      %s713 = int_to_ptr.vmem [resolvable:$true] %s712
      %718 = dma.vmem_to_hbm [thread:$0]  %s713, 256, %s3, [#allocation4], 128, 128, 8
    $region29: #{tpu_custom_call.1} parent=1 // pred_fallthru
      _
    // Predicated region
    $region30: #{tpu_custom_call.1} parent=1 // pred_check
      _
    $region31: #{tpu_custom_call.1} parent=1 // pred_check_branch
      %720 = sbr.rel (0) target = $region33
    $region32: #{tpu_custom_call.1} parent=1 // pred_region
      %721 = dma.done [#allocation4], 256
    $region33: #{tpu_custom_call.1} parent=1 // pred_fallthru
      _
    %722 = vsyncpa [#allocation3], 1
    %723 = vsyncpa [#allocation6], 1
    %724 = vsyncpa [#allocation4], 1

</llo_original>
